<compile_context>
chip_gen: v5e
topology: v5e:2x2
jax: 0.10.0
libtpu: 0.0.40
codegen_flags: <defaults>
</compile_context>

<pallas_src>
import functools

import jax
import jax.numpy as jnp
from jax import lax
from jax.experimental import pallas as pl
from jax.experimental.pallas import tpu as pltpu


def _fused_fc_out_kernel(x_ref, wtap_ref, bc_ref, wl_ref, bl_ref, o_ref,
                         flat_ref, *, co, ci, h, w, kk):
    """One grid step == one sample.

    x_ref   : [1, ci, L]    H-padded, spatially-flattened, lane-padded input
                            (L = h*w + 2*(kk//2)*w + 2*w; zeros in the pads)
    wtap_ref: [kk*kk, co, ci]  conv weight, one (co,ci) tap per (dh,dw)
    bc_ref  : [co, 1]       conv bias
    wl_ref  : [co*h*w, cl]  classifier weight (lin_w.T, NCHW-flat row order)
    bl_ref  : [1, cl]       classifier bias
    o_ref   : [1, 1, cl]    logits for this sample
    flat_ref: [1, co*h*w]   VMEM scratch holding the NCHW-flattened activation
    """
    hw = h * w
    pw = kk // 2          # spatial padding (1 for a 3x3 'same' conv)
    lpad = w              # extra zero lanes added on each side in the wrapper

    xall = x_ref[0]       # [ci, L] — load once, taps are value slices below

    # Within-row (width) coordinate of every output position, for the
    # left/right boundary masks (the H boundary is handled by the zero rows
    # baked into the padded input).
    col = lax.broadcasted_iota(jnp.int32, (1, hw), 1) % w     # [1, hw]

    # ---- conv as 9 shifted matmuls, accumulated in registers --------------
    acc = jnp.zeros((co, hw), jnp.float32)
    for dh in range(kk):
        for dw in range(kk):
            d = lpad + dh * w + dw - pw          # static lane offset of this tap
            win = xall[:, d:d + hw]              # [ci, hw]
            tap = jnp.dot(wtap_ref[dh * kk + dw], win,
                          preferred_element_type=jnp.float32)  # [co, hw]
            ddw = dw - pw
            if ddw < 0:                          # reads wrap into previous row
                tap = jnp.where(col >= -ddw, tap, 0.0)
            elif ddw > 0:                        # reads wrap into next row
                tap = jnp.where(col < w - ddw, tap, 0.0)
            acc = acc + tap

    feat_t = jnp.maximum(acc + bc_ref[...], 0.0)               # [co, hw]

    # ---- NCHW flatten (torch x.view(N, -1)) via VMEM scratch ---------------
    # flat[0, c*hw + p] = feat_t[c, p]; done with aligned lane-slice stores so
    # no in-register lane reshape is needed.
    for c in range(co):
        flat_ref[:, c * hw:(c + 1) * hw] = feat_t[c:c + 1, :]

    # ---- classifier: single dot, bias fused ---------------------------------
    logits = jnp.dot(flat_ref[...], wl_ref[...],
                     preferred_element_type=jnp.float32) + bl_ref[...]
    o_ref[0] = logits.astype(o_ref.dtype)


def fc_out_forward(x, params):
    """x: [N, C_in, H, W] (NCHW, like PyTorch). Returns logits [N, num_classes]."""
    n, ci, h, w = x.shape
    conv_w, conv_b, lin_w, lin_b = params
    co, _, kk, _ = conv_w.shape
    cl = lin_w.shape[0]
    hw = h * w
    pw = kk // 2
    lpad = w

    # Cheap trace-time / XLA prep (weights reshaped once, input padded+flattened):
    #   pad H by pw zero rows, flatten (H,W), then add `lpad` zero lanes per side
    #   so every conv tap inside the kernel is a static, in-range lane slice.
    xh = jnp.pad(x.astype(jnp.float32), ((0, 0), (0, 0), (pw, pw), (0, 0)))
    xflat = xh.reshape(n, ci, (h + 2 * pw) * w)
    xflat = jnp.pad(xflat, ((0, 0), (0, 0), (lpad, lpad)))     # [n, ci, L]
    lflat = xflat.shape[-1]

    wtap = conv_w.transpose(2, 3, 0, 1).reshape(kk * kk, co, ci).astype(jnp.float32)
    bc = conv_b.reshape(co, 1).astype(jnp.float32)
    wl = lin_w.T.astype(jnp.float32)                           # [co*hw, cl]
    bl = lin_b.reshape(1, cl).astype(jnp.float32)

    kern = functools.partial(_fused_fc_out_kernel, co=co, ci=ci, h=h, w=w, kk=kk)

    out = pl.pallas_call(
        kern,
        out_shape=jax.ShapeDtypeStruct((n, 1, cl), jnp.float32),
        grid_spec=pltpu.PrefetchScalarGridSpec(
            num_scalar_prefetch=0,
            grid=(n,),
            in_specs=[
                pl.BlockSpec((1, ci, lflat), lambda i: (i, 0, 0)),   # per-sample input
                pl.BlockSpec((kk * kk, co, ci), lambda i: (0, 0, 0)),  # conv taps (resident)
                pl.BlockSpec((co, 1), lambda i: (0, 0)),              # conv bias
                pl.BlockSpec((co * hw, cl), lambda i: (0, 0)),        # classifier W (resident)
                pl.BlockSpec((1, cl), lambda i: (0, 0)),              # classifier bias
            ],
            out_specs=pl.BlockSpec((1, 1, cl), lambda i: (i, 0, 0)),
            scratch_shapes=[pltpu.VMEM((1, co * hw), jnp.float32)],
        ),
        compiler_params=pltpu.CompilerParams(
            dimension_semantics=("parallel",)),    # lets v7x split the batch across TCs
    )(xflat, wtap, bc, wl, bl)
    return out[:, 0, :]


if __name__ == "__main__":
    # Small shapes consistent with the module's forward
    N, C_IN, H, W = 2, 4, 16, 16
    C_OUT, NUM_CLASSES = 8, 10

    key = jax.random.PRNGKey(0)
    k1, k2, k3, k4, k5 = jax.random.split(key, 5)

    # Deterministic synthetic parameters (no checkpoint load).
    conv_w = jax.random.normal(k1, (C_OUT, C_IN, 3, 3), jnp.float32) * 0.1
    conv_b = jax.random.normal(k2, (C_OUT,), jnp.float32) * 0.1
    lin_w = jax.random.normal(k3, (NUM_CLASSES, C_OUT * H * W), jnp.float32) * 0.02
    lin_b = jax.random.normal(k4, (NUM_CLASSES,), jnp.float32) * 0.02

    x = jax.random.normal(k5, (N, C_IN, H, W), jnp.float32)

    fwd = jax.jit(fc_out_forward)
    out = jax.block_until_ready(fwd(x, (conv_w, conv_b, lin_w, lin_b)))

    # Pure-JAX reference check (same math: conv -> relu -> flatten -> linear).
    feat_ref = lax.conv_general_dilated(
        x, conv_w, window_strides=(1, 1), padding="SAME",
        dimension_numbers=("NCHW", "OIHW", "NCHW")) + conv_b[None, :, None, None]
    feat_ref = jnp.maximum(feat_ref, 0.0)
    ref = feat_ref.reshape(N, -1) @ lin_w.T + lin_b

    assert out.shape == (N, NUM_CLASSES)
    assert jnp.allclose(out, ref, atol=1e-4, rtol=1e-4)

    print("KERNEL_OK")
</pallas_src>

<mosaic_0001>
module attributes {stable_mosaic.version = 11 : i64} {
  func.func @_fused_fc_out_kernel(%arg0: i32, %arg1: memref<1x4x320xf32, #tpu.memory_space<vmem>>, %arg2: memref<9x8x4xf32, #tpu.memory_space<vmem>>, %arg3: memref<8x1xf32, #tpu.memory_space<vmem>>, %arg4: memref<2048x10xf32, #tpu.memory_space<vmem>>, %arg5: memref<1x10xf32, #tpu.memory_space<vmem>>, %arg6: memref<1x1x10xf32, #tpu.memory_space<vmem>>, %arg7: memref<1x2048xf32, #tpu.memory_space<vmem>>) attributes {dimension_semantics = [#tpu.dimension_semantics<parallel>], iteration_bounds = array<i64: 2>, scalar_prefetch = 0 : i64, scratch_operands = 1 : i64, tpu.core_type = #tpu.core_type<tc>, window_params = [{transform_indices = @transform_0, window_bounds = array<i64: 1, 4, 320>}, {pipeline_mode = #tpu.pipeline_mode<synchronous>, transform_indices = @transform_1, window_bounds = array<i64: 9, 8, 4>}, {pipeline_mode = #tpu.pipeline_mode<synchronous>, transform_indices = @transform_2, window_bounds = array<i64: 8, 1>}, {pipeline_mode = #tpu.pipeline_mode<synchronous>, transform_indices = @transform_3, window_bounds = array<i64: 2048, 10>}, {pipeline_mode = #tpu.pipeline_mode<synchronous>, transform_indices = @transform_4, window_bounds = array<i64: 1, 10>}, {transform_indices = @transform_5, window_bounds = array<i64: 1, 1, 10>}]} {
    %c0 = arith.constant 0 : index
    %c0_0 = arith.constant 0 : index
    %c0_1 = arith.constant 0 : index
    %0 = vector.load %arg1[%c0, %c0_0, %c0_1] : memref<1x4x320xf32, #tpu.memory_space<vmem>>, vector<1x4x320xf32>
    %1 = vector.shape_cast %0 : vector<1x4x320xf32> to vector<4x320xf32>
    %2 = tpu.iota {dimensions = array<i32: 1>} : vector<1x256xi32>
    %c16_i32 = arith.constant 16 : i32
    %c0_i32 = arith.constant 0 : i32
    %3 = arith.cmpi eq, %c16_i32, %c0_i32 : i32
    %c1_i32 = arith.constant 1 : i32
    %4 = arith.select %3, %c1_i32, %c16_i32 : i32
    %5 = vector.broadcast %4 : i32 to vector<1x256xi32>
    %6 = arith.remsi %2, %5 : vector<1x256xi32>
    %c0_i32_2 = arith.constant 0 : i32
    %7 = vector.broadcast %c0_i32_2 : i32 to vector<1x256xi32>
    %8 = arith.cmpi ne, %6, %7 : vector<1x256xi32>
    %c0_i32_3 = arith.constant 0 : i32
    %9 = vector.broadcast %c0_i32_3 : i32 to vector<1x256xi32>
    %10 = arith.cmpi slt, %6, %9 : vector<1x256xi32>
    %c0_i32_4 = arith.constant 0 : i32
    %11 = arith.cmpi slt, %4, %c0_i32_4 : i32
    %12 = vector.broadcast %11 : i1 to vector<1x256xi1>
    %13 = vector.broadcast %12 : vector<1x256xi1> to vector<1x256xi1>
    %14 = arith.xori %10, %13 : vector<1x256xi1>
    %15 = arith.andi %14, %8 : vector<1x256xi1>
    %16 = vector.broadcast %4 : i32 to vector<1x256xi32>
    %17 = arith.addi %6, %16 : vector<1x256xi32>
    %18 = arith.select %15, %17, %6 : vector<1x256xi1>, vector<1x256xi32>
    %cst = arith.constant 0.000000e+00 : f32
    %19 = vector.broadcast %cst : f32 to vector<8x256xf32>
    %20 = vector.extract_strided_slice %1 {offsets = [0, 15], sizes = [4, 256], strides = [1, 1]} : vector<4x320xf32> to vector<4x256xf32>
    %c0_5 = arith.constant 0 : index
    %c0_6 = arith.constant 0 : index
    %c0_7 = arith.constant 0 : index
    %21 = vector.load %arg2[%c0_5, %c0_6, %c0_7] : memref<9x8x4xf32, #tpu.memory_space<vmem>>, vector<1x8x4xf32>
    %22 = vector.shape_cast %21 : vector<1x8x4xf32> to vector<8x4xf32>
    %cst_8 = arith.constant dense<0.000000e+00> : vector<8x256xf32>
    %23 = tpu.matmul %22, %20, %cst_8 {dimension_numbers = #tpu.dot_dimension_numbers<[1], [0], [0], [1], [0, 0, 1, 1], [], []>} : vector<8x4xf32>, vector<4x256xf32>, vector<8x256xf32> -> vector<8x256xf32>
    %c1_i32_9 = arith.constant 1 : i32
    %24 = vector.broadcast %c1_i32_9 : i32 to vector<1x256xi32>
    %25 = arith.cmpi sge, %18, %24 : vector<1x256xi32>
    %cst_10 = arith.constant 0.000000e+00 : f32
    %26 = vector.shape_cast %25 : vector<1x256xi1> to vector<1x256xi1>
    %27 = vector.broadcast %26 : vector<1x256xi1> to vector<8x256xi1>
    %28 = vector.broadcast %cst_10 : f32 to vector<8x256xf32>
    %29 = arith.select %27, %23, %28 : vector<8x256xi1>, vector<8x256xf32>
    %30 = arith.addf %19, %29 : vector<8x256xf32>
    %31 = vector.extract_strided_slice %1 {offsets = [0, 16], sizes = [4, 256], strides = [1, 1]} : vector<4x320xf32> to vector<4x256xf32>
    %c1 = arith.constant 1 : index
    %c0_11 = arith.constant 0 : index
    %c0_12 = arith.constant 0 : index
    %32 = vector.load %arg2[%c1, %c0_11, %c0_12] : memref<9x8x4xf32, #tpu.memory_space<vmem>>, vector<1x8x4xf32>
    %33 = vector.shape_cast %32 : vector<1x8x4xf32> to vector<8x4xf32>
    %cst_13 = arith.constant dense<0.000000e+00> : vector<8x256xf32>
    %34 = tpu.matmul %33, %31, %cst_13 {dimension_numbers = #tpu.dot_dimension_numbers<[1], [0], [0], [1], [0, 0, 1, 1], [], []>} : vector<8x4xf32>, vector<4x256xf32>, vector<8x256xf32> -> vector<8x256xf32>
    %35 = arith.addf %30, %34 : vector<8x256xf32>
    %36 = vector.extract_strided_slice %1 {offsets = [0, 17], sizes = [4, 256], strides = [1, 1]} : vector<4x320xf32> to vector<4x256xf32>
    %c2 = arith.constant 2 : index
    %c0_14 = arith.constant 0 : index
    %c0_15 = arith.constant 0 : index
    %37 = vector.load %arg2[%c2, %c0_14, %c0_15] : memref<9x8x4xf32, #tpu.memory_space<vmem>>, vector<1x8x4xf32>
    %38 = vector.shape_cast %37 : vector<1x8x4xf32> to vector<8x4xf32>
    %cst_16 = arith.constant dense<0.000000e+00> : vector<8x256xf32>
    %39 = tpu.matmul %38, %36, %cst_16 {dimension_numbers = #tpu.dot_dimension_numbers<[1], [0], [0], [1], [0, 0, 1, 1], [], []>} : vector<8x4xf32>, vector<4x256xf32>, vector<8x256xf32> -> vector<8x256xf32>
    %c15_i32 = arith.constant 15 : i32
    %40 = vector.broadcast %c15_i32 : i32 to vector<1x256xi32>
    %41 = arith.cmpi slt, %18, %40 : vector<1x256xi32>
    %cst_17 = arith.constant 0.000000e+00 : f32
    %42 = vector.shape_cast %41 : vector<1x256xi1> to vector<1x256xi1>
    %43 = vector.broadcast %42 : vector<1x256xi1> to vector<8x256xi1>
    %44 = vector.broadcast %cst_17 : f32 to vector<8x256xf32>
    %45 = arith.select %43, %39, %44 : vector<8x256xi1>, vector<8x256xf32>
    %46 = arith.addf %35, %45 : vector<8x256xf32>
    %47 = vector.extract_strided_slice %1 {offsets = [0, 31], sizes = [4, 256], strides = [1, 1]} : vector<4x320xf32> to vector<4x256xf32>
    %c3 = arith.constant 3 : index
    %c0_18 = arith.constant 0 : index
    %c0_19 = arith.constant 0 : index
    %48 = vector.load %arg2[%c3, %c0_18, %c0_19] : memref<9x8x4xf32, #tpu.memory_space<vmem>>, vector<1x8x4xf32>
    %49 = vector.shape_cast %48 : vector<1x8x4xf32> to vector<8x4xf32>
    %cst_20 = arith.constant dense<0.000000e+00> : vector<8x256xf32>
    %50 = tpu.matmul %49, %47, %cst_20 {dimension_numbers = #tpu.dot_dimension_numbers<[1], [0], [0], [1], [0, 0, 1, 1], [], []>} : vector<8x4xf32>, vector<4x256xf32>, vector<8x256xf32> -> vector<8x256xf32>
    %c1_i32_21 = arith.constant 1 : i32
    %51 = vector.broadcast %c1_i32_21 : i32 to vector<1x256xi32>
    %52 = arith.cmpi sge, %18, %51 : vector<1x256xi32>
    %cst_22 = arith.constant 0.000000e+00 : f32
    %53 = vector.shape_cast %52 : vector<1x256xi1> to vector<1x256xi1>
    %54 = vector.broadcast %53 : vector<1x256xi1> to vector<8x256xi1>
    %55 = vector.broadcast %cst_22 : f32 to vector<8x256xf32>
    %56 = arith.select %54, %50, %55 : vector<8x256xi1>, vector<8x256xf32>
    %57 = arith.addf %46, %56 : vector<8x256xf32>
    %58 = vector.extract_strided_slice %1 {offsets = [0, 32], sizes = [4, 256], strides = [1, 1]} : vector<4x320xf32> to vector<4x256xf32>
    %c4 = arith.constant 4 : index
    %c0_23 = arith.constant 0 : index
    %c0_24 = arith.constant 0 : index
    %59 = vector.load %arg2[%c4, %c0_23, %c0_24] : memref<9x8x4xf32, #tpu.memory_space<vmem>>, vector<1x8x4xf32>
    %60 = vector.shape_cast %59 : vector<1x8x4xf32> to vector<8x4xf32>
    %cst_25 = arith.constant dense<0.000000e+00> : vector<8x256xf32>
    %61 = tpu.matmul %60, %58, %cst_25 {dimension_numbers = #tpu.dot_dimension_numbers<[1], [0], [0], [1], [0, 0, 1, 1], [], []>} : vector<8x4xf32>, vector<4x256xf32>, vector<8x256xf32> -> vector<8x256xf32>
    %62 = arith.addf %57, %61 : vector<8x256xf32>
    %63 = vector.extract_strided_slice %1 {offsets = [0, 33], sizes = [4, 256], strides = [1, 1]} : vector<4x320xf32> to vector<4x256xf32>
    %c5 = arith.constant 5 : index
    %c0_26 = arith.constant 0 : index
    %c0_27 = arith.constant 0 : index
    %64 = vector.load %arg2[%c5, %c0_26, %c0_27] : memref<9x8x4xf32, #tpu.memory_space<vmem>>, vector<1x8x4xf32>
    %65 = vector.shape_cast %64 : vector<1x8x4xf32> to vector<8x4xf32>
    %cst_28 = arith.constant dense<0.000000e+00> : vector<8x256xf32>
    %66 = tpu.matmul %65, %63, %cst_28 {dimension_numbers = #tpu.dot_dimension_numbers<[1], [0], [0], [1], [0, 0, 1, 1], [], []>} : vector<8x4xf32>, vector<4x256xf32>, vector<8x256xf32> -> vector<8x256xf32>
    %c15_i32_29 = arith.constant 15 : i32
    %67 = vector.broadcast %c15_i32_29 : i32 to vector<1x256xi32>
    %68 = arith.cmpi slt, %18, %67 : vector<1x256xi32>
    %cst_30 = arith.constant 0.000000e+00 : f32
    %69 = vector.shape_cast %68 : vector<1x256xi1> to vector<1x256xi1>
    %70 = vector.broadcast %69 : vector<1x256xi1> to vector<8x256xi1>
    %71 = vector.broadcast %cst_30 : f32 to vector<8x256xf32>
    %72 = arith.select %70, %66, %71 : vector<8x256xi1>, vector<8x256xf32>
    %73 = arith.addf %62, %72 : vector<8x256xf32>
    %74 = vector.extract_strided_slice %1 {offsets = [0, 47], sizes = [4, 256], strides = [1, 1]} : vector<4x320xf32> to vector<4x256xf32>
    %c6 = arith.constant 6 : index
    %c0_31 = arith.constant 0 : index
    %c0_32 = arith.constant 0 : index
    %75 = vector.load %arg2[%c6, %c0_31, %c0_32] : memref<9x8x4xf32, #tpu.memory_space<vmem>>, vector<1x8x4xf32>
    %76 = vector.shape_cast %75 : vector<1x8x4xf32> to vector<8x4xf32>
    %cst_33 = arith.constant dense<0.000000e+00> : vector<8x256xf32>
    %77 = tpu.matmul %76, %74, %cst_33 {dimension_numbers = #tpu.dot_dimension_numbers<[1], [0], [0], [1], [0, 0, 1, 1], [], []>} : vector<8x4xf32>, vector<4x256xf32>, vector<8x256xf32> -> vector<8x256xf32>
    %c1_i32_34 = arith.constant 1 : i32
    %78 = vector.broadcast %c1_i32_34 : i32 to vector<1x256xi32>
    %79 = arith.cmpi sge, %18, %78 : vector<1x256xi32>
    %cst_35 = arith.constant 0.000000e+00 : f32
    %80 = vector.shape_cast %79 : vector<1x256xi1> to vector<1x256xi1>
    %81 = vector.broadcast %80 : vector<1x256xi1> to vector<8x256xi1>
    %82 = vector.broadcast %cst_35 : f32 to vector<8x256xf32>
    %83 = arith.select %81, %77, %82 : vector<8x256xi1>, vector<8x256xf32>
    %84 = arith.addf %73, %83 : vector<8x256xf32>
    %85 = vector.extract_strided_slice %1 {offsets = [0, 48], sizes = [4, 256], strides = [1, 1]} : vector<4x320xf32> to vector<4x256xf32>
    %c7 = arith.constant 7 : index
    %c0_36 = arith.constant 0 : index
    %c0_37 = arith.constant 0 : index
    %86 = vector.load %arg2[%c7, %c0_36, %c0_37] : memref<9x8x4xf32, #tpu.memory_space<vmem>>, vector<1x8x4xf32>
    %87 = vector.shape_cast %86 : vector<1x8x4xf32> to vector<8x4xf32>
    %cst_38 = arith.constant dense<0.000000e+00> : vector<8x256xf32>
    %88 = tpu.matmul %87, %85, %cst_38 {dimension_numbers = #tpu.dot_dimension_numbers<[1], [0], [0], [1], [0, 0, 1, 1], [], []>} : vector<8x4xf32>, vector<4x256xf32>, vector<8x256xf32> -> vector<8x256xf32>
    %89 = arith.addf %84, %88 : vector<8x256xf32>
    %90 = vector.extract_strided_slice %1 {offsets = [0, 49], sizes = [4, 256], strides = [1, 1]} : vector<4x320xf32> to vector<4x256xf32>
    %c8 = arith.constant 8 : index
    %c0_39 = arith.constant 0 : index
    %c0_40 = arith.constant 0 : index
    %91 = vector.load %arg2[%c8, %c0_39, %c0_40] : memref<9x8x4xf32, #tpu.memory_space<vmem>>, vector<1x8x4xf32>
    %92 = vector.shape_cast %91 : vector<1x8x4xf32> to vector<8x4xf32>
    %cst_41 = arith.constant dense<0.000000e+00> : vector<8x256xf32>
    %93 = tpu.matmul %92, %90, %cst_41 {dimension_numbers = #tpu.dot_dimension_numbers<[1], [0], [0], [1], [0, 0, 1, 1], [], []>} : vector<8x4xf32>, vector<4x256xf32>, vector<8x256xf32> -> vector<8x256xf32>
    %c15_i32_42 = arith.constant 15 : i32
    %94 = vector.broadcast %c15_i32_42 : i32 to vector<1x256xi32>
    %95 = arith.cmpi slt, %18, %94 : vector<1x256xi32>
    %cst_43 = arith.constant 0.000000e+00 : f32
    %96 = vector.shape_cast %95 : vector<1x256xi1> to vector<1x256xi1>
    %97 = vector.broadcast %96 : vector<1x256xi1> to vector<8x256xi1>
    %98 = vector.broadcast %cst_43 : f32 to vector<8x256xf32>
    %99 = arith.select %97, %93, %98 : vector<8x256xi1>, vector<8x256xf32>
    %100 = arith.addf %89, %99 : vector<8x256xf32>
    %c0_44 = arith.constant 0 : index
    %c0_45 = arith.constant 0 : index
    %101 = vector.load %arg3[%c0_44, %c0_45] : memref<8x1xf32, #tpu.memory_space<vmem>>, vector<8x1xf32>
    %102 = vector.broadcast %101 : vector<8x1xf32> to vector<8x256xf32>
    %103 = arith.addf %100, %102 : vector<8x256xf32>
    %cst_46 = arith.constant 0.000000e+00 : f32
    %104 = vector.broadcast %cst_46 : f32 to vector<8x256xf32>
    %105 = arith.maximumf %103, %104 : vector<8x256xf32>
    %106 = vector.extract_strided_slice %105 {offsets = [0, 0], sizes = [1, 256], strides = [1, 1]} : vector<8x256xf32> to vector<1x256xf32>
    %c0_47 = arith.constant 0 : index
    %c0_48 = arith.constant 0 : index
    %107 = vector.load %arg7[%c0_47, %c0_48] : memref<1x2048xf32, #tpu.memory_space<vmem>>, vector<1x256xf32>
    tpu.vector_store %arg7[%c0_47, %c0_48], %106 {strides = array<i32>} : memref<1x2048xf32, #tpu.memory_space<vmem>>, vector<1x256xf32>,
    %108 = vector.extract_strided_slice %105 {offsets = [1, 0], sizes = [1, 256], strides = [1, 1]} : vector<8x256xf32> to vector<1x256xf32>
    %c0_49 = arith.constant 0 : index
    %c256 = arith.constant 256 : index
    %109 = vector.load %arg7[%c0_49, %c256] : memref<1x2048xf32, #tpu.memory_space<vmem>>, vector<1x256xf32>
    tpu.vector_store %arg7[%c0_49, %c256], %108 {strides = array<i32>} : memref<1x2048xf32, #tpu.memory_space<vmem>>, vector<1x256xf32>,
    %110 = vector.extract_strided_slice %105 {offsets = [2, 0], sizes = [1, 256], strides = [1, 1]} : vector<8x256xf32> to vector<1x256xf32>
    %c0_50 = arith.constant 0 : index
    %c512 = arith.constant 512 : index
    %111 = vector.load %arg7[%c0_50, %c512] : memref<1x2048xf32, #tpu.memory_space<vmem>>, vector<1x256xf32>
    tpu.vector_store %arg7[%c0_50, %c512], %110 {strides = array<i32>} : memref<1x2048xf32, #tpu.memory_space<vmem>>, vector<1x256xf32>,
    %112 = vector.extract_strided_slice %105 {offsets = [3, 0], sizes = [1, 256], strides = [1, 1]} : vector<8x256xf32> to vector<1x256xf32>
    %c0_51 = arith.constant 0 : index
    %c768 = arith.constant 768 : index
    %113 = vector.load %arg7[%c0_51, %c768] : memref<1x2048xf32, #tpu.memory_space<vmem>>, vector<1x256xf32>
    tpu.vector_store %arg7[%c0_51, %c768], %112 {strides = array<i32>} : memref<1x2048xf32, #tpu.memory_space<vmem>>, vector<1x256xf32>,
    %114 = vector.extract_strided_slice %105 {offsets = [4, 0], sizes = [1, 256], strides = [1, 1]} : vector<8x256xf32> to vector<1x256xf32>
    %c0_52 = arith.constant 0 : index
    %c1024 = arith.constant 1024 : index
    %115 = vector.load %arg7[%c0_52, %c1024] : memref<1x2048xf32, #tpu.memory_space<vmem>>, vector<1x256xf32>
    tpu.vector_store %arg7[%c0_52, %c1024], %114 {strides = array<i32>} : memref<1x2048xf32, #tpu.memory_space<vmem>>, vector<1x256xf32>,
    %116 = vector.extract_strided_slice %105 {offsets = [5, 0], sizes = [1, 256], strides = [1, 1]} : vector<8x256xf32> to vector<1x256xf32>
    %c0_53 = arith.constant 0 : index
    %c1280 = arith.constant 1280 : index
    %117 = vector.load %arg7[%c0_53, %c1280] : memref<1x2048xf32, #tpu.memory_space<vmem>>, vector<1x256xf32>
    tpu.vector_store %arg7[%c0_53, %c1280], %116 {strides = array<i32>} : memref<1x2048xf32, #tpu.memory_space<vmem>>, vector<1x256xf32>,
    %118 = vector.extract_strided_slice %105 {offsets = [6, 0], sizes = [1, 256], strides = [1, 1]} : vector<8x256xf32> to vector<1x256xf32>
    %c0_54 = arith.constant 0 : index
    %c1536 = arith.constant 1536 : index
    %119 = vector.load %arg7[%c0_54, %c1536] : memref<1x2048xf32, #tpu.memory_space<vmem>>, vector<1x256xf32>
    tpu.vector_store %arg7[%c0_54, %c1536], %118 {strides = array<i32>} : memref<1x2048xf32, #tpu.memory_space<vmem>>, vector<1x256xf32>,
    %120 = vector.extract_strided_slice %105 {offsets = [7, 0], sizes = [1, 256], strides = [1, 1]} : vector<8x256xf32> to vector<1x256xf32>
    %c0_55 = arith.constant 0 : index
    %c1792 = arith.constant 1792 : index
    %121 = vector.load %arg7[%c0_55, %c1792] : memref<1x2048xf32, #tpu.memory_space<vmem>>, vector<1x256xf32>
    tpu.vector_store %arg7[%c0_55, %c1792], %120 {strides = array<i32>} : memref<1x2048xf32, #tpu.memory_space<vmem>>, vector<1x256xf32>,
    %c0_56 = arith.constant 0 : index
    %c0_57 = arith.constant 0 : index
    %122 = vector.load %arg7[%c0_56, %c0_57] : memref<1x2048xf32, #tpu.memory_space<vmem>>, vector<1x2048xf32>
    %c0_58 = arith.constant 0 : index
    %c0_59 = arith.constant 0 : index
    %123 = vector.load %arg4[%c0_58, %c0_59] : memref<2048x10xf32, #tpu.memory_space<vmem>>, vector<2048x10xf32>
    %cst_60 = arith.constant dense<0.000000e+00> : vector<1x10xf32>
    %124 = tpu.matmul %122, %123, %cst_60 {dimension_numbers = #tpu.dot_dimension_numbers<[1], [0], [0], [1], [0, 0, 1, 1], [], []>} : vector<1x2048xf32>, vector<2048x10xf32>, vector<1x10xf32> -> vector<1x10xf32>
    %c0_61 = arith.constant 0 : index
    %c0_62 = arith.constant 0 : index
    %125 = vector.load %arg5[%c0_61, %c0_62] : memref<1x10xf32, #tpu.memory_space<vmem>>, vector<1x10xf32>
    %126 = arith.addf %124, %125 : vector<1x10xf32>
    %c0_63 = arith.constant 0 : index
    %c0_64 = arith.constant 0 : index
    %c0_65 = arith.constant 0 : index
    %127 = vector.load %arg6[%c0_63, %c0_64, %c0_65] : memref<1x1x10xf32, #tpu.memory_space<vmem>>, vector<1x1x10xf32>
    %128 = vector.shape_cast %127 : vector<1x1x10xf32> to vector<1x10xf32>
    %129 = vector.shape_cast %126 : vector<1x10xf32> to vector<1x1x10xf32>
    tpu.vector_store %arg6[%c0_63, %c0_64, %c0_65], %129 {strides = array<i32>} : memref<1x1x10xf32, #tpu.memory_space<vmem>>, vector<1x1x10xf32>,
    return
  }
  func.func @transform_0(%arg0: i32) -> (i32, i32, i32) {
    %c0_i32 = arith.constant 0 : i32
    %c0_i32_0 = arith.constant 0 : i32
    %c0_i32_1 = arith.constant 0 : i32
    return %arg0, %c0_i32, %c0_i32_0 : i32, i32, i32
  }
  func.func @transform_1(%arg0: i32) -> (i32, i32, i32) {
    %c0_i32 = arith.constant 0 : i32
    %c0_i32_0 = arith.constant 0 : i32
    %c0_i32_1 = arith.constant 0 : i32
    %c0_i32_2 = arith.constant 0 : i32
    return %c0_i32, %c0_i32_0, %c0_i32_1 : i32, i32, i32
  }
  func.func @transform_2(%arg0: i32) -> (i32, i32) {
    %c0_i32 = arith.constant 0 : i32
    %c0_i32_0 = arith.constant 0 : i32
    %c0_i32_1 = arith.constant 0 : i32
    return %c0_i32, %c0_i32_0 : i32, i32
  }
  func.func @transform_3(%arg0: i32) -> (i32, i32) {
    %c0_i32 = arith.constant 0 : i32
    %c0_i32_0 = arith.constant 0 : i32
    %c0_i32_1 = arith.constant 0 : i32
    return %c0_i32, %c0_i32_0 : i32, i32
  }
  func.func @transform_4(%arg0: i32) -> (i32, i32) {
    %c0_i32 = arith.constant 0 : i32
    %c0_i32_0 = arith.constant 0 : i32
    %c0_i32_1 = arith.constant 0 : i32
    return %c0_i32, %c0_i32_0 : i32, i32
  }
  func.func @transform_5(%arg0: i32) -> (i32, i32, i32) {
    %c0_i32 = arith.constant 0 : i32
    %c0_i32_0 = arith.constant 0 : i32
    %c0_i32_1 = arith.constant 0 : i32
    return %arg0, %c0_i32, %c0_i32_0 : i32, i32, i32
  }
}

</mosaic_0001>

<llo_original>
// kernel: fc_out_forward.1
$region0: #{fc_out_forward.1}
  #allocation0 [shape = 'u32[]', space=smem, size = 0x4, offset = 0x4, fixed_abs, tag = 'smem constant byte address 0x4 - core index']
  #allocation1 [shape = 'u32[72,128]{1,0:T(1,128)}', space=vmem, size = 0x9000, scoped, tag = 'internal scratch']
  #allocation2 [shape = 'f32[1,2048]{1,0:T(1,128)}', space=vmem, size = 0x2000, scoped, tag = 'scratch operand']
  %s0 = inlined_call_operand.vmem [shape: f32[2,4,320], index: 0, kind: input, shape index: {}]
  %s1 = inlined_call_operand.vmem [shape: f32[9,8,4], index: 1, kind: input, shape index: {}]
  %s2 = inlined_call_operand.vmem [shape: f32[8,1], index: 2, kind: input, shape index: {}]
  %s3 = inlined_call_operand.vmem [shape: f32[2048,10], index: 3, kind: input, shape index: {}]
  %s4 = inlined_call_operand.vmem [shape: f32[1,10], index: 4, kind: input, shape index: {}]
  %s5 = inlined_call_operand.hbm [shape: f32[2,1,10], index: 5, kind: output, shape index: {}]
  %s6 = sld [smem:[#allocation0]]
  $region53: #{fc_out_forward.1} parent=0
    _
  %s8 = ssub.s32 1, %s6
  %s9 = scalar_select 0, %s8, %s6
  $region1: #{fc_out_forward.1} parent=0
    #allocation3 [shape = 'u8[1024]{0}', space=vmem, size = 0x400, scoped, tag = 'output window, operand 0']
    #allocation4 [shape = 's32[2]{0}', space=sflag, size = 0x8, scoped, tag = 'scoped memory for fc_out_forward.1']
    %10 = vsyncpa [#allocation4], 0
    %s11 = scalar_lea.sflag [#allocation4], 1
    %12 = vsyncpa %s11, 0
    loop: start=0, step=1, limit=4
    $region2: #{fc_out_forward.1} parent=1 // loop_pre_header
      _
    $region3: #{fc_out_forward.1} parent=1 // loop_header
      %s14 = sphi 0, %s18
      %p15 = scmp.ge.s32.totalorder %s14, 4
      %s24 = sphi 0, %s26
      %s27 = sphi 0, %s24
      %s28 = sphi 0, %s27
      %s44 = sphi 0, %s28
      %s48 = sphi 0, %s48
      %s50 = sphi 0, %s48
      %s51 = sphi 0, %s50
      %s65 = sphi 0, %s51
      %s69 = sphi 0, %s69
      %s71 = sphi 0, %s69
      %s72 = sphi 0, %s71
      %s86 = sphi 0, %s72
      %s90 = sphi 0, %s90
      %s92 = sphi 0, %s90
      %s93 = sphi 0, %s92
      %s107 = sphi 0, %s93
      %s111 = sphi 0, %s111
      %s113 = sphi 0, %s111
      %s114 = sphi 0, %s113
      %s128 = sphi 0, %s114
      %s134 = sphi 0, %s136
      %s137 = sphi 0, %s134
      %s138 = sphi 0, %s137
      %s154 = sphi 0, %s138
    $region4: #{fc_out_forward.1} parent=1 // loop_header_branch
      %17 = sbr.rel (%p15) target = $region8
    $region5: #{fc_out_forward.1} parent=1 // loop_body
      %s19 = ssub.s32 %s14, 1
      %s20 = ssub.s32 %s14, 2
      %s21 = sadd.s32 %s14, 1
      %s22 = ssub.s32 %s14, %s21
      %p23 = scmp.eq.s32.totalorder %s22, 0
      %s25 = sadd.s32 %s24, 1
      %s26 = scalar_select %p23, %s24, %s25
      %p29 = pneg %p23
      %p30 = scmp.eq.s32.totalorder %s14, 1
      %p31 = por %p29, %p30
      %p32 = scmp.ne.s32.totalorder %s24, %s27
      %p33 = scmp.eq.s32.totalorder %s14, 0
      %p34 = por %p32, %p33
      %p35 = scmp.ne.s32.totalorder %s24, %s27
      %p36 = scmp.eq.s32.totalorder %s19, 1
      %p37 = por %p35, %p36
      %p38 = scmp.ne.s32.totalorder %s27, %s28
      %p39 = scmp.eq.s32.totalorder %s19, 0
      %p40 = por %p38, %p39
      %p41 = scmp.ne.s32.totalorder %s27, %s28
      %p42 = scmp.eq.s32.totalorder %s20, 1
      %p43 = por %p41, %p42
      %p45 = scmp.ne.s32.totalorder %s28, %s44
      %p46 = scmp.eq.s32.totalorder %s20, 0
      %p47 = por %p45, %p46
      %s49 = sadd.s32 %s48, 1
      %p52 = scmp.eq.s32.totalorder %s14, 1
      %p53 = scmp.ne.s32.totalorder %s48, %s50
      %p54 = scmp.eq.s32.totalorder %s14, 0
      %p55 = por %p53, %p54
      %p56 = scmp.ne.s32.totalorder %s48, %s50
      %p57 = scmp.eq.s32.totalorder %s19, 1
      %p58 = por %p56, %p57
      %p59 = scmp.ne.s32.totalorder %s50, %s51
      %p60 = scmp.eq.s32.totalorder %s19, 0
      %p61 = por %p59, %p60
      %p62 = scmp.ne.s32.totalorder %s50, %s51
      %p63 = scmp.eq.s32.totalorder %s20, 1
      %p64 = por %p62, %p63
      %p66 = scmp.ne.s32.totalorder %s51, %s65
      %p67 = scmp.eq.s32.totalorder %s20, 0
      %p68 = por %p66, %p67
      %s70 = sadd.s32 %s69, 1
      %p73 = scmp.eq.s32.totalorder %s14, 1
      %p74 = scmp.ne.s32.totalorder %s69, %s71
      %p75 = scmp.eq.s32.totalorder %s14, 0
      %p76 = por %p74, %p75
      %p77 = scmp.ne.s32.totalorder %s69, %s71
      %p78 = scmp.eq.s32.totalorder %s19, 1
      %p79 = por %p77, %p78
      %p80 = scmp.ne.s32.totalorder %s71, %s72
      %p81 = scmp.eq.s32.totalorder %s19, 0
      %p82 = por %p80, %p81
      %p83 = scmp.ne.s32.totalorder %s71, %s72
      %p84 = scmp.eq.s32.totalorder %s20, 1
      %p85 = por %p83, %p84
      %p87 = scmp.ne.s32.totalorder %s72, %s86
      %p88 = scmp.eq.s32.totalorder %s20, 0
      %p89 = por %p87, %p88
      %s91 = sadd.s32 %s90, 1
      %p94 = scmp.eq.s32.totalorder %s14, 1
      %p95 = scmp.ne.s32.totalorder %s90, %s92
      %p96 = scmp.eq.s32.totalorder %s14, 0
      %p97 = por %p95, %p96
      %p98 = scmp.ne.s32.totalorder %s90, %s92
      %p99 = scmp.eq.s32.totalorder %s19, 1
      %p100 = por %p98, %p99
      %p101 = scmp.ne.s32.totalorder %s92, %s93
      %p102 = scmp.eq.s32.totalorder %s19, 0
      %p103 = por %p101, %p102
      %p104 = scmp.ne.s32.totalorder %s92, %s93
      %p105 = scmp.eq.s32.totalorder %s20, 1
      %p106 = por %p104, %p105
      %p108 = scmp.ne.s32.totalorder %s93, %s107
      %p109 = scmp.eq.s32.totalorder %s20, 0
      %p110 = por %p108, %p109
      %s112 = sadd.s32 %s111, 1
      %p115 = scmp.eq.s32.totalorder %s14, 1
      %p116 = scmp.ne.s32.totalorder %s111, %s113
      %p117 = scmp.eq.s32.totalorder %s14, 0
      %p118 = por %p116, %p117
      %p119 = scmp.ne.s32.totalorder %s111, %s113
      %p120 = scmp.eq.s32.totalorder %s19, 1
      %p121 = por %p119, %p120
      %p122 = scmp.ne.s32.totalorder %s113, %s114
      %p123 = scmp.eq.s32.totalorder %s19, 0
      %p124 = por %p122, %p123
      %p125 = scmp.ne.s32.totalorder %s113, %s114
      %p126 = scmp.eq.s32.totalorder %s20, 1
      %p127 = por %p125, %p126
      %p129 = scmp.ne.s32.totalorder %s114, %s128
      %p130 = scmp.eq.s32.totalorder %s20, 0
      %p131 = por %p129, %p130
      %s132 = ssub.s32 %s14, %s21
      %p133 = scmp.eq.s32.totalorder %s132, 0
      %s135 = sadd.s32 %s134, 1
      %s136 = scalar_select %p133, %s134, %s135
      %p139 = pneg %p133
      %p140 = scmp.eq.s32.totalorder %s14, 1
      %p141 = por %p139, %p140
      %p142 = scmp.ne.s32.totalorder %s134, %s137
      %p143 = scmp.eq.s32.totalorder %s14, 0
      %p144 = por %p142, %p143
      %p145 = scmp.ne.s32.totalorder %s134, %s137
      %p146 = scmp.eq.s32.totalorder %s19, 1
      %p147 = por %p145, %p146
      %p148 = scmp.ne.s32.totalorder %s137, %s138
      %p149 = scmp.eq.s32.totalorder %s19, 0
      %p150 = por %p148, %p149
      %p151 = scmp.ne.s32.totalorder %s137, %s138
      %p152 = scmp.eq.s32.totalorder %s20, 1
      %p153 = por %p151, %p152
      %p155 = scmp.ne.s32.totalorder %s138, %s154
      %p156 = scmp.eq.s32.totalorder %s20, 0
      %p157 = por %p155, %p156
      %p158 = scmp.le.s32.totalorder 1, %s14
      %p159 = scmp.lt.s32.totalorder %s14, 3
      %p160 = pnand %p158, %p159
      %p161 = pneg %p160
      // Predicated region
      $region9: #{fc_out_forward.1} parent=5 // pred_check
        _
      $region10: #{fc_out_forward.1} parent=5 // pred_check_branch
        %163 = sbr.rel (%p160) target = $region12
      $region11: #{fc_out_forward.1} parent=5 // pred_region
        %s164 = ssub.s32 %s14, 1
        // Predicated region
        $region13: #{fc_out_forward.1} parent=11 // pred_check
          %p165 = pneg %p61
        $region14: #{fc_out_forward.1} parent=11 // pred_check_branch
          %167 = sbr.rel (%p165) target = $region16
        $region15: #{fc_out_forward.1} parent=11 // pred_region
          _
        $region16: #{fc_out_forward.1} parent=11 // pred_fallthru
          _
        // Predicated region
        $region17: #{fc_out_forward.1} parent=11 // pred_check
          %p168 = pneg %p82
        $region18: #{fc_out_forward.1} parent=11 // pred_check_branch
          %170 = sbr.rel (%p168) target = $region20
        $region19: #{fc_out_forward.1} parent=11 // pred_region
          _
        $region20: #{fc_out_forward.1} parent=11 // pred_fallthru
          _
        // Predicated region
        $region21: #{fc_out_forward.1} parent=11 // pred_check
          %p171 = pneg %p103
        $region22: #{fc_out_forward.1} parent=11 // pred_check_branch
          %173 = sbr.rel (%p171) target = $region24
        $region23: #{fc_out_forward.1} parent=11 // pred_region
          _
        $region24: #{fc_out_forward.1} parent=11 // pred_fallthru
          _
        // Predicated region
        $region25: #{fc_out_forward.1} parent=11 // pred_check
          %p174 = pneg %p124
        $region26: #{fc_out_forward.1} parent=11 // pred_check_branch
          %176 = sbr.rel (%p174) target = $region28
        $region27: #{fc_out_forward.1} parent=11 // pred_region
          _
        $region28: #{fc_out_forward.1} parent=11 // pred_fallthru
          _
      $region12: #{fc_out_forward.1} parent=5 // pred_fallthru
        _
      %p177 = scmp.lt.s32.totalorder %s14, 2
      // Predicated region
      $region29: #{fc_out_forward.1} parent=5 // pred_check
        %p178 = pneg %p177
      $region30: #{fc_out_forward.1} parent=5 // pred_check_branch
        %180 = sbr.rel (%p178) target = $region32
      $region31: #{fc_out_forward.1} parent=5 // pred_region
        // Predicated region
        $region33: #{fc_out_forward.1} parent=31 // pred_check
          %p181 = pneg %p34
        $region34: #{fc_out_forward.1} parent=31 // pred_check_branch
          %183 = sbr.rel (%p181) target = $region36
        $region35: #{fc_out_forward.1} parent=31 // pred_region
          %p184 = scmp.lt.s32.totalorder %s14, 1
          %s185 = scalar_select %p184, %s14, 1
          %s186 = smul.addr %s185, 3
          %s187 = smul.addr %s186, 4
          %s188 = scalar_lea.vmem %s0, %s187
        $region36: #{fc_out_forward.1} parent=31 // pred_fallthru
          _
      $region32: #{fc_out_forward.1} parent=5 // pred_fallthru
        _
      %p189 = scmp.le.s32.totalorder 1, %s14
      %p190 = scmp.lt.s32.totalorder %s14, 3
      %p191 = pnand %p189, %p190
      %p192 = pneg %p191
      // Predicated region
      $region37: #{fc_out_forward.1} parent=5 // pred_check
        _
      $region38: #{fc_out_forward.1} parent=5 // pred_check_branch
        %194 = sbr.rel (%p191) target = $region40
      $region39: #{fc_out_forward.1} parent=5 // pred_region
        %s195 = ssub.s32 %s14, 1
        %p196 = scmp.lt.s32.totalorder %s19, 1
        %s197 = scalar_select %p196, %s19, 1
        %s198 = smul.addr %s197, 3
        %s199 = smul.addr %s198, 4
        %s200 = scalar_lea.vmem %s0, %s199
        %p201 = pneg %p40
        %p202 = pneg %p37
        %p203 = pneg %p61
        %p204 = pneg %p58
        %p205 = pneg %p82
        %p206 = pneg %p79
        %p207 = pneg %p103
        %p208 = pneg %p100
        %p209 = pneg %p124
        %p210 = pneg %p121
        %p211 = pneg %p150
        %p212 = pneg %p147
        %s213 = sand.u32 %s137, 1
        %s214 = scalar_lea.sflag [#allocation4], %s213
        %s215 = sand.u32 %s137, 1
        %s216 = scalar_lea.vmem [#allocation3], %s215
        %p217 = scmp.lt.s32.totalorder %s19, 1
        %s218 = scalar_select %p217, %s19, 1
        %s219 = smul.addr %s218, 3
        %s220 = smul.addr %s219, 4
        %s221 = scalar_lea.vmem %s0, %s220
        %v222 = vld [vmem:[%s221] sm:$0xff]
        %v223 = vld [vmem:[%s221 + $0x8] sm:$0xf]
        %v224 = vlaneseq
        %v225 = vand.u32 %v224, 127
        %v226 = vadd.s32 %v225, 128
        %vm227 = vcmp.lt.s32.totalorder %v225, 0
        %v228 = vsub.s32 0, %v225
        %v229 = vsel %vm227, %v228, %v225
        %v230 = vshrl.u32 %v229, 4
        %v231 = vand.u32 %v229, 15
        %v232 = vsub.s32 0, %v231
        %v233 = vsel %vm227, %v232, %v231
        %vm234 = vcmp.lt.s32.totalorder %v226, 0
        %v235 = vsub.s32 0, %v226
        %v236 = vsel %vm234, %v235, %v226
        %v237 = vshrl.u32 %v236, 4
        %v238 = vand.u32 %v236, 15
        %v239 = vsub.s32 0, %v238
        %v240 = vsel %vm234, %v239, %v238
        %vm241 = vcmp.ne.s32.totalorder %v233, 0
        %vm242 = vcmp.ne.s32.totalorder %v240, 0
        %vm243 = vcmp.lt.s32.totalorder %v233, 0
        %vm244 = vcmp.lt.s32.totalorder %v240, 0
        %vm245 = vmand %vm243, %vm241
        %vm246 = vmand %vm244, %vm242
        %v247 = vadd.s32 %v233, 16
        %v248 = vadd.s32 %v240, 16
        %v249 = vsel %vm245, %v247, %v233
        %v250 = vsel %vm246, %v248, %v240
        %v251 = vld [vmem:[%s1] sm:$0xff]
        %254 = vst [vmem:[#allocation1] ss:$2 sm:$0xff] %v222
        %s255 = scalar_lea.vmem [#allocation1], 16
        %256 = vst [vmem:[%s255] ss:$2 sm:$0xff] %v223
        %v257 = vld.sshfl [vmem:[#allocation1] sm:$0xff pattern:$0x75316420]
        %v258 = vld.sshfl [vmem:[#allocation1 + $0x8] sm:$0xff pattern:$0x75316420]
        %v259 = vld.sshfl [vmem:[#allocation1 + $0x10] sm:$0xff pattern:$0x75316420]
        %260 = vrot.lane.b32.xlu0 %v257, 113
        %v261 = vpop.permute.xlu0 %260
        %262 = vrot.lane.b32.xlu0 %v258, 113
        %v263 = vpop.permute.xlu0 %262
        %264 = vrot.lane.b32.xlu0 %v259, 113
        %v265 = vpop.permute.xlu0 %264
        %vm266 = vcmask 924672
        %v267 = vsel %vm266, %v261, %v263
        %v268 = vsel %vm266, %v263, %v265
        %vm269 = vcmask 31744
        %v271 = vsel %vm269, %v251, 0
        %vm273 = vcmask 1043456
        %v274 = vsel %vm273, %v267, 0
        %v276 = vsel %vm273, %v268, 0
        %278 = vmatpush.msra.mxu0 0.0
        %279 = vmatpush.msra.mxu0 0.0
        %280 = vmatpush.msra.mxu0 0.0
        %281 = vmatpush.msra.mxu0 0.0
        %282 = vmatpush.msra.mxu0 0.0
        %283 = vmatpush.msra.mxu0 0.0
        %284 = vmatpush.msra.mxu0 0.0
        %285 = vmatpush.msra.mxu0 0.0
        %286 = vmatpush.msra.mxu0 0.0
        %287 = vmatpush.msra.mxu0 0.0
        %288 = vmatpush.msra.mxu0 0.0
        %289 = vmatpush.msra.mxu0 0.0
        %290 = vmatpush.msra.mxu0 0.0
        %291 = vmatpush.msra.mxu0 0.0
        %292 = vmatpush.msra.mxu0 0.0
        %293 = vmatpush.msra.mxu0 %v274
        %294 = vmatmul.f32.gmra.mxu0 %v271
        %v295 = vpop.f32.mrf.mxu0
        %v296 = vadd.f32 0.0, %v295
        %297 = vdwg.mxu0
        %298 = vmatpush.msra.mxu0 0.0
        %299 = vmatpush.msra.mxu0 0.0
        %300 = vmatpush.msra.mxu0 0.0
        %301 = vmatpush.msra.mxu0 0.0
        %302 = vmatpush.msra.mxu0 0.0
        %303 = vmatpush.msra.mxu0 0.0
        %304 = vmatpush.msra.mxu0 0.0
        %305 = vmatpush.msra.mxu0 0.0
        %306 = vmatpush.msra.mxu0 0.0
        %307 = vmatpush.msra.mxu0 0.0
        %308 = vmatpush.msra.mxu0 0.0
        %309 = vmatpush.msra.mxu0 0.0
        %310 = vmatpush.msra.mxu0 0.0
        %311 = vmatpush.msra.mxu0 0.0
        %312 = vmatpush.msra.mxu0 0.0
        %313 = vmatpush.msra.mxu0 %v276
        %314 = vmatmul.f32.gmra.mxu0 %v271
        %v315 = vpop.f32.mrf.mxu0
        %v316 = vadd.f32 0.0, %v315
        %317 = vdwg.mxu0
        %vm318 = vcmp.ge.s32.totalorder %v249, 1
        %vm319 = vcmp.ge.s32.totalorder %v250, 1
        %v320 = vsel %vm318, 1, 0
        %v321 = vsel %vm319, 1, 0
        %vm322 = vcmp.eq.s32.totalorder %v320, 1
        %vm323 = vcmp.eq.s32.totalorder %v321, 1
        %v324 = vsel %vm322, %v296, 0.0
        %v325 = vsel %vm323, %v316, 0.0
        %v326 = vadd.f32 %v324, 0.0
        %v327 = vadd.f32 %v325, 0.0
        %s328 = scalar_lea.vmem %s1, 8
        %v329 = vld [vmem:[%s328] sm:$0xff]
        %330 = vst [vmem:[#allocation1] ss:$2 sm:$0xff] %v222
        %s331 = scalar_lea.vmem [#allocation1], 16
        %332 = vst [vmem:[%s331] ss:$2 sm:$0xff] %v223
        %v333 = vld.sshfl [vmem:[#allocation1] sm:$0xff pattern:$0x75316420]
        %v334 = vld.sshfl [vmem:[#allocation1 + $0x8] sm:$0xff pattern:$0x75316420]
        %v335 = vld.sshfl [vmem:[#allocation1 + $0x10] sm:$0xff pattern:$0x75316420]
        %336 = vrot.lane.b32.xlu0 %v333, 112
        %v337 = vpop.permute.xlu0 %336
        %338 = vrot.lane.b32.xlu0 %v334, 112
        %v339 = vpop.permute.xlu0 %338
        %340 = vrot.lane.b32.xlu0 %v335, 112
        %v341 = vpop.permute.xlu0 %340
        %vm342 = vcmask 916480
        %v343 = vsel %vm342, %v337, %v339
        %v344 = vsel %vm342, %v339, %v341
        %v346 = vsel %vm269, %v329, 0
        %v348 = vsel %vm273, %v343, 0
        %v350 = vsel %vm273, %v344, 0
        %352 = vmatpush.msra.mxu0 0.0
        %353 = vmatpush.msra.mxu0 0.0
        %354 = vmatpush.msra.mxu0 0.0
        %355 = vmatpush.msra.mxu0 0.0
        %356 = vmatpush.msra.mxu0 0.0
        %357 = vmatpush.msra.mxu0 0.0
        %358 = vmatpush.msra.mxu0 0.0
        %359 = vmatpush.msra.mxu0 0.0
        %360 = vmatpush.msra.mxu0 0.0
        %361 = vmatpush.msra.mxu0 0.0
        %362 = vmatpush.msra.mxu0 0.0
        %363 = vmatpush.msra.mxu0 0.0
        %364 = vmatpush.msra.mxu0 0.0
        %365 = vmatpush.msra.mxu0 0.0
        %366 = vmatpush.msra.mxu0 0.0
        %367 = vmatpush.msra.mxu0 %v348
        %368 = vmatmul.f32.gmra.mxu0 %v346
        %v369 = vpop.f32.mrf.mxu0
        %v370 = vadd.f32 0.0, %v369
        %371 = vdwg.mxu0
        %372 = vmatpush.msra.mxu0 0.0
        %373 = vmatpush.msra.mxu0 0.0
        %374 = vmatpush.msra.mxu0 0.0
        %375 = vmatpush.msra.mxu0 0.0
        %376 = vmatpush.msra.mxu0 0.0
        %377 = vmatpush.msra.mxu0 0.0
        %378 = vmatpush.msra.mxu0 0.0
        %379 = vmatpush.msra.mxu0 0.0
        %380 = vmatpush.msra.mxu0 0.0
        %381 = vmatpush.msra.mxu0 0.0
        %382 = vmatpush.msra.mxu0 0.0
        %383 = vmatpush.msra.mxu0 0.0
        %384 = vmatpush.msra.mxu0 0.0
        %385 = vmatpush.msra.mxu0 0.0
        %386 = vmatpush.msra.mxu0 0.0
        %387 = vmatpush.msra.mxu0 %v350
        %388 = vmatmul.f32.gmra.mxu0 %v346
        %v389 = vpop.f32.mrf.mxu0
        %v390 = vadd.f32 0.0, %v389
        %391 = vdwg.mxu0
        %v392 = vadd.f32 %v326, %v370
        %v393 = vadd.f32 %v327, %v390
        %s394 = scalar_lea.vmem %s1, 16
        %v395 = vld [vmem:[%s394] sm:$0xff]
        %396 = vst [vmem:[#allocation1] ss:$2 sm:$0xff] %v222
        %s397 = scalar_lea.vmem [#allocation1], 16
        %398 = vst [vmem:[%s397] ss:$2 sm:$0xff] %v223
        %v399 = vld.sshfl [vmem:[#allocation1] sm:$0xff pattern:$0x75316420]
        %v400 = vld.sshfl [vmem:[#allocation1 + $0x8] sm:$0xff pattern:$0x75316420]
        %v401 = vld.sshfl [vmem:[#allocation1 + $0x10] sm:$0xff pattern:$0x75316420]
        %402 = vrot.lane.b32.xlu0 %v399, 111
        %v403 = vpop.permute.xlu0 %402
        %404 = vrot.lane.b32.xlu0 %v400, 111
        %v405 = vpop.permute.xlu0 %404
        %406 = vrot.lane.b32.xlu0 %v401, 111
        %v407 = vpop.permute.xlu0 %406
        %vm408 = vcmask 908288
        %v409 = vsel %vm408, %v403, %v405
        %v410 = vsel %vm408, %v405, %v407
        %v412 = vsel %vm269, %v395, 0
        %v414 = vsel %vm273, %v409, 0
        %v416 = vsel %vm273, %v410, 0
        %418 = vmatpush.msra.mxu0 0.0
        %419 = vmatpush.msra.mxu0 0.0
        %420 = vmatpush.msra.mxu0 0.0
        %421 = vmatpush.msra.mxu0 0.0
        %422 = vmatpush.msra.mxu0 0.0
        %423 = vmatpush.msra.mxu0 0.0
        %424 = vmatpush.msra.mxu0 0.0
        %425 = vmatpush.msra.mxu0 0.0
        %426 = vmatpush.msra.mxu0 0.0
        %427 = vmatpush.msra.mxu0 0.0
        %428 = vmatpush.msra.mxu0 0.0
        %429 = vmatpush.msra.mxu0 0.0
        %430 = vmatpush.msra.mxu0 0.0
        %431 = vmatpush.msra.mxu0 0.0
        %432 = vmatpush.msra.mxu0 0.0
        %433 = vmatpush.msra.mxu0 %v414
        %434 = vmatmul.f32.gmra.mxu0 %v412
        %v435 = vpop.f32.mrf.mxu0
        %v436 = vadd.f32 0.0, %v435
        %437 = vdwg.mxu0
        %438 = vmatpush.msra.mxu0 0.0
        %439 = vmatpush.msra.mxu0 0.0
        %440 = vmatpush.msra.mxu0 0.0
        %441 = vmatpush.msra.mxu0 0.0
        %442 = vmatpush.msra.mxu0 0.0
        %443 = vmatpush.msra.mxu0 0.0
        %444 = vmatpush.msra.mxu0 0.0
        %445 = vmatpush.msra.mxu0 0.0
        %446 = vmatpush.msra.mxu0 0.0
        %447 = vmatpush.msra.mxu0 0.0
        %448 = vmatpush.msra.mxu0 0.0
        %449 = vmatpush.msra.mxu0 0.0
        %450 = vmatpush.msra.mxu0 0.0
        %451 = vmatpush.msra.mxu0 0.0
        %452 = vmatpush.msra.mxu0 0.0
        %453 = vmatpush.msra.mxu0 %v416
        %454 = vmatmul.f32.gmra.mxu0 %v412
        %v455 = vpop.f32.mrf.mxu0
        %v456 = vadd.f32 0.0, %v455
        %457 = vdwg.mxu0
        %vm458 = vcmp.lt.s32.totalorder %v249, 15
        %vm459 = vcmp.lt.s32.totalorder %v250, 15
        %v460 = vsel %vm458, 1, 0
        %v461 = vsel %vm459, 1, 0
        %vm462 = vcmp.eq.s32.totalorder %v460, 1
        %vm463 = vcmp.eq.s32.totalorder %v461, 1
        %v464 = vsel %vm462, %v436, 0.0
        %v465 = vsel %vm463, %v456, 0.0
        %v466 = vadd.f32 %v392, %v464
        %v467 = vadd.f32 %v393, %v465
        %s468 = scalar_lea.vmem %s1, 24
        %v469 = vld [vmem:[%s468] sm:$0xff]
        %470 = vst [vmem:[#allocation1] ss:$2 sm:$0xff] %v222
        %s471 = scalar_lea.vmem [#allocation1], 16
        %472 = vst [vmem:[%s471] ss:$2 sm:$0xff] %v223
        %v473 = vld.sshfl [vmem:[#allocation1] sm:$0xff pattern:$0x75316420]
        %v474 = vld.sshfl [vmem:[#allocation1 + $0x8] sm:$0xff pattern:$0x75316420]
        %v475 = vld.sshfl [vmem:[#allocation1 + $0x10] sm:$0xff pattern:$0x75316420]
        %476 = vrot.lane.b32.xlu0 %v473, 97
        %v477 = vpop.permute.xlu0 %476
        %478 = vrot.lane.b32.xlu0 %v474, 97
        %v479 = vpop.permute.xlu0 %478
        %480 = vrot.lane.b32.xlu0 %v475, 97
        %v481 = vpop.permute.xlu0 %480
        %vm482 = vcmask 793600
        %v483 = vsel %vm482, %v477, %v479
        %v484 = vsel %vm482, %v479, %v481
        %v486 = vsel %vm269, %v469, 0
        %v488 = vsel %vm273, %v483, 0
        %v490 = vsel %vm273, %v484, 0
        %492 = vmatpush.msra.mxu0 0.0
        %493 = vmatpush.msra.mxu0 0.0
        %494 = vmatpush.msra.mxu0 0.0
        %495 = vmatpush.msra.mxu0 0.0
        %496 = vmatpush.msra.mxu0 0.0
        %497 = vmatpush.msra.mxu0 0.0
        %498 = vmatpush.msra.mxu0 0.0
        %499 = vmatpush.msra.mxu0 0.0
        %500 = vmatpush.msra.mxu0 0.0
        %501 = vmatpush.msra.mxu0 0.0
        %502 = vmatpush.msra.mxu0 0.0
        %503 = vmatpush.msra.mxu0 0.0
        %504 = vmatpush.msra.mxu0 0.0
        %505 = vmatpush.msra.mxu0 0.0
        %506 = vmatpush.msra.mxu0 0.0
        %507 = vmatpush.msra.mxu0 %v488
        %508 = vmatmul.f32.gmra.mxu0 %v486
        %v509 = vpop.f32.mrf.mxu0
        %v510 = vadd.f32 0.0, %v509
        %511 = vdwg.mxu0
        %512 = vmatpush.msra.mxu0 0.0
        %513 = vmatpush.msra.mxu0 0.0
        %514 = vmatpush.msra.mxu0 0.0
        %515 = vmatpush.msra.mxu0 0.0
        %516 = vmatpush.msra.mxu0 0.0
        %517 = vmatpush.msra.mxu0 0.0
        %518 = vmatpush.msra.mxu0 0.0
        %519 = vmatpush.msra.mxu0 0.0
        %520 = vmatpush.msra.mxu0 0.0
        %521 = vmatpush.msra.mxu0 0.0
        %522 = vmatpush.msra.mxu0 0.0
        %523 = vmatpush.msra.mxu0 0.0
        %524 = vmatpush.msra.mxu0 0.0
        %525 = vmatpush.msra.mxu0 0.0
        %526 = vmatpush.msra.mxu0 0.0
        %527 = vmatpush.msra.mxu0 %v490
        %528 = vmatmul.f32.gmra.mxu0 %v486
        %v529 = vpop.f32.mrf.mxu0
        %v530 = vadd.f32 0.0, %v529
        %531 = vdwg.mxu0
        %v532 = vsel %vm322, %v510, 0.0
        %v533 = vsel %vm323, %v530, 0.0
        %v534 = vadd.f32 %v466, %v532
        %v535 = vadd.f32 %v467, %v533
        %s536 = scalar_lea.vmem %s1, 32
        %v537 = vld [vmem:[%s536] sm:$0xff]
        %538 = vst [vmem:[#allocation1] ss:$2 sm:$0xff] %v222
        %s539 = scalar_lea.vmem [#allocation1], 16
        %540 = vst [vmem:[%s539] ss:$2 sm:$0xff] %v223
        %v541 = vld.sshfl [vmem:[#allocation1] sm:$0xff pattern:$0x75316420]
        %v542 = vld.sshfl [vmem:[#allocation1 + $0x8] sm:$0xff pattern:$0x75316420]
        %v543 = vld.sshfl [vmem:[#allocation1 + $0x10] sm:$0xff pattern:$0x75316420]
        %544 = vrot.lane.b32.xlu0 %v541, 96
        %v545 = vpop.permute.xlu0 %544
        %546 = vrot.lane.b32.xlu0 %v542, 96
        %v547 = vpop.permute.xlu0 %546
        %548 = vrot.lane.b32.xlu0 %v543, 96
        %v549 = vpop.permute.xlu0 %548
        %vm550 = vcmask 785408
        %v551 = vsel %vm550, %v545, %v547
        %v552 = vsel %vm550, %v547, %v549
        %v554 = vsel %vm269, %v537, 0
        %v556 = vsel %vm273, %v551, 0
        %v558 = vsel %vm273, %v552, 0
        %560 = vmatpush.msra.mxu0 0.0
        %561 = vmatpush.msra.mxu0 0.0
        %562 = vmatpush.msra.mxu0 0.0
        %563 = vmatpush.msra.mxu0 0.0
        %564 = vmatpush.msra.mxu0 0.0
        %565 = vmatpush.msra.mxu0 0.0
        %566 = vmatpush.msra.mxu0 0.0
        %567 = vmatpush.msra.mxu0 0.0
        %568 = vmatpush.msra.mxu0 0.0
        %569 = vmatpush.msra.mxu0 0.0
        %570 = vmatpush.msra.mxu0 0.0
        %571 = vmatpush.msra.mxu0 0.0
        %572 = vmatpush.msra.mxu0 0.0
        %573 = vmatpush.msra.mxu0 0.0
        %574 = vmatpush.msra.mxu0 0.0
        %575 = vmatpush.msra.mxu0 %v556
        %576 = vmatmul.f32.gmra.mxu0 %v554
        %v577 = vpop.f32.mrf.mxu0
        %v578 = vadd.f32 0.0, %v577
        %579 = vdwg.mxu0
        %580 = vmatpush.msra.mxu0 0.0
        %581 = vmatpush.msra.mxu0 0.0
        %582 = vmatpush.msra.mxu0 0.0
        %583 = vmatpush.msra.mxu0 0.0
        %584 = vmatpush.msra.mxu0 0.0
        %585 = vmatpush.msra.mxu0 0.0
        %586 = vmatpush.msra.mxu0 0.0
        %587 = vmatpush.msra.mxu0 0.0
        %588 = vmatpush.msra.mxu0 0.0
        %589 = vmatpush.msra.mxu0 0.0
        %590 = vmatpush.msra.mxu0 0.0
        %591 = vmatpush.msra.mxu0 0.0
        %592 = vmatpush.msra.mxu0 0.0
        %593 = vmatpush.msra.mxu0 0.0
        %594 = vmatpush.msra.mxu0 0.0
        %595 = vmatpush.msra.mxu0 %v558
        %596 = vmatmul.f32.gmra.mxu0 %v554
        %v597 = vpop.f32.mrf.mxu0
        %v598 = vadd.f32 0.0, %v597
        %599 = vdwg.mxu0
        %v600 = vadd.f32 %v534, %v578
        %v601 = vadd.f32 %v535, %v598
        %s602 = scalar_lea.vmem %s1, 40
        %v603 = vld [vmem:[%s602] sm:$0xff]
        %604 = vst [vmem:[#allocation1] ss:$2 sm:$0xff] %v222
        %s605 = scalar_lea.vmem [#allocation1], 16
        %606 = vst [vmem:[%s605] ss:$2 sm:$0xff] %v223
        %v607 = vld.sshfl [vmem:[#allocation1] sm:$0xff pattern:$0x75316420]
        %v608 = vld.sshfl [vmem:[#allocation1 + $0x8] sm:$0xff pattern:$0x75316420]
        %v609 = vld.sshfl [vmem:[#allocation1 + $0x10] sm:$0xff pattern:$0x75316420]
        %610 = vrot.lane.b32.xlu0 %v607, 95
        %v611 = vpop.permute.xlu0 %610
        %612 = vrot.lane.b32.xlu0 %v608, 95
        %v613 = vpop.permute.xlu0 %612
        %614 = vrot.lane.b32.xlu0 %v609, 95
        %v615 = vpop.permute.xlu0 %614
        %vm616 = vcmask 777216
        %v617 = vsel %vm616, %v611, %v613
        %v618 = vsel %vm616, %v613, %v615
        %v620 = vsel %vm269, %v603, 0
        %v622 = vsel %vm273, %v617, 0
        %v624 = vsel %vm273, %v618, 0
        %626 = vmatpush.msra.mxu0 0.0
        %627 = vmatpush.msra.mxu0 0.0
        %628 = vmatpush.msra.mxu0 0.0
        %629 = vmatpush.msra.mxu0 0.0
        %630 = vmatpush.msra.mxu0 0.0
        %631 = vmatpush.msra.mxu0 0.0
        %632 = vmatpush.msra.mxu0 0.0
        %633 = vmatpush.msra.mxu0 0.0
        %634 = vmatpush.msra.mxu0 0.0
        %635 = vmatpush.msra.mxu0 0.0
        %636 = vmatpush.msra.mxu0 0.0
        %637 = vmatpush.msra.mxu0 0.0
        %638 = vmatpush.msra.mxu0 0.0
        %639 = vmatpush.msra.mxu0 0.0
        %640 = vmatpush.msra.mxu0 0.0
        %641 = vmatpush.msra.mxu0 %v622
        %642 = vmatmul.f32.gmra.mxu0 %v620
        %v643 = vpop.f32.mrf.mxu0
        %v644 = vadd.f32 0.0, %v643
        %645 = vdwg.mxu0
        %646 = vmatpush.msra.mxu0 0.0
        %647 = vmatpush.msra.mxu0 0.0
        %648 = vmatpush.msra.mxu0 0.0
        %649 = vmatpush.msra.mxu0 0.0
        %650 = vmatpush.msra.mxu0 0.0
        %651 = vmatpush.msra.mxu0 0.0
        %652 = vmatpush.msra.mxu0 0.0
        %653 = vmatpush.msra.mxu0 0.0
        %654 = vmatpush.msra.mxu0 0.0
        %655 = vmatpush.msra.mxu0 0.0
        %656 = vmatpush.msra.mxu0 0.0
        %657 = vmatpush.msra.mxu0 0.0
        %658 = vmatpush.msra.mxu0 0.0
        %659 = vmatpush.msra.mxu0 0.0
        %660 = vmatpush.msra.mxu0 0.0
        %661 = vmatpush.msra.mxu0 %v624
        %662 = vmatmul.f32.gmra.mxu0 %v620
        %v663 = vpop.f32.mrf.mxu0
        %v664 = vadd.f32 0.0, %v663
        %665 = vdwg.mxu0
        %v666 = vsel %vm462, %v644, 0.0
        %v667 = vsel %vm463, %v664, 0.0
        %v668 = vadd.f32 %v600, %v666
        %v669 = vadd.f32 %v601, %v667
        %s670 = scalar_lea.vmem %s1, 48
        %v671 = vld [vmem:[%s670] sm:$0xff]
        %672 = vst [vmem:[#allocation1] ss:$2 sm:$0xff] %v222
        %s673 = scalar_lea.vmem [#allocation1], 16
        %674 = vst [vmem:[%s673] ss:$2 sm:$0xff] %v223
        %v675 = vld.sshfl [vmem:[#allocation1] sm:$0xff pattern:$0x75316420]
        %v676 = vld.sshfl [vmem:[#allocation1 + $0x8] sm:$0xff pattern:$0x75316420]
        %v677 = vld.sshfl [vmem:[#allocation1 + $0x10] sm:$0xff pattern:$0x75316420]
        %678 = vrot.lane.b32.xlu0 %v675, 81
        %v679 = vpop.permute.xlu0 %678
        %680 = vrot.lane.b32.xlu0 %v676, 81
        %v681 = vpop.permute.xlu0 %680
        %682 = vrot.lane.b32.xlu0 %v677, 81
        %v683 = vpop.permute.xlu0 %682
        %vm684 = vcmask 662528
        %v685 = vsel %vm684, %v679, %v681
        %v686 = vsel %vm684, %v681, %v683
        %v688 = vsel %vm269, %v671, 0
        %v690 = vsel %vm273, %v685, 0
        %v692 = vsel %vm273, %v686, 0
        %694 = vmatpush.msra.mxu0 0.0
        %695 = vmatpush.msra.mxu0 0.0
        %696 = vmatpush.msra.mxu0 0.0
        %697 = vmatpush.msra.mxu0 0.0
        %698 = vmatpush.msra.mxu0 0.0
        %699 = vmatpush.msra.mxu0 0.0
        %700 = vmatpush.msra.mxu0 0.0
        %701 = vmatpush.msra.mxu0 0.0
        %702 = vmatpush.msra.mxu0 0.0
        %703 = vmatpush.msra.mxu0 0.0
        %704 = vmatpush.msra.mxu0 0.0
        %705 = vmatpush.msra.mxu0 0.0
        %706 = vmatpush.msra.mxu0 0.0
        %707 = vmatpush.msra.mxu0 0.0
        %708 = vmatpush.msra.mxu0 0.0
        %709 = vmatpush.msra.mxu0 %v690
        %710 = vmatmul.f32.gmra.mxu0 %v688
        %v711 = vpop.f32.mrf.mxu0
        %v712 = vadd.f32 0.0, %v711
        %713 = vdwg.mxu0
        %714 = vmatpush.msra.mxu0 0.0
        %715 = vmatpush.msra.mxu0 0.0
        %716 = vmatpush.msra.mxu0 0.0
        %717 = vmatpush.msra.mxu0 0.0
        %718 = vmatpush.msra.mxu0 0.0
        %719 = vmatpush.msra.mxu0 0.0
        %720 = vmatpush.msra.mxu0 0.0
        %721 = vmatpush.msra.mxu0 0.0
        %722 = vmatpush.msra.mxu0 0.0
        %723 = vmatpush.msra.mxu0 0.0
        %724 = vmatpush.msra.mxu0 0.0
        %725 = vmatpush.msra.mxu0 0.0
        %726 = vmatpush.msra.mxu0 0.0
        %727 = vmatpush.msra.mxu0 0.0
        %728 = vmatpush.msra.mxu0 0.0
        %729 = vmatpush.msra.mxu0 %v692
        %730 = vmatmul.f32.gmra.mxu0 %v688
        %v731 = vpop.f32.mrf.mxu0
        %v732 = vadd.f32 0.0, %v731
        %733 = vdwg.mxu0
        %v734 = vsel %vm322, %v712, 0.0
        %v735 = vsel %vm323, %v732, 0.0
        %v736 = vadd.f32 %v668, %v734
        %v737 = vadd.f32 %v669, %v735
        %s738 = scalar_lea.vmem %s1, 56
        %v739 = vld [vmem:[%s738] sm:$0xff]
        %740 = vst [vmem:[#allocation1] ss:$2 sm:$0xff] %v222
        %s741 = scalar_lea.vmem [#allocation1], 16
        %742 = vst [vmem:[%s741] ss:$2 sm:$0xff] %v223
        %v743 = vld.sshfl [vmem:[#allocation1] sm:$0xff pattern:$0x75316420]
        %v744 = vld.sshfl [vmem:[#allocation1 + $0x8] sm:$0xff pattern:$0x75316420]
        %v745 = vld.sshfl [vmem:[#allocation1 + $0x10] sm:$0xff pattern:$0x75316420]
        %746 = vrot.lane.b32.xlu0 %v743, 80
        %v747 = vpop.permute.xlu0 %746
        %748 = vrot.lane.b32.xlu0 %v744, 80
        %v749 = vpop.permute.xlu0 %748
        %750 = vrot.lane.b32.xlu0 %v745, 80
        %v751 = vpop.permute.xlu0 %750
        %vm752 = vcmask 654336
        %v753 = vsel %vm752, %v747, %v749
        %v754 = vsel %vm752, %v749, %v751
        %v756 = vsel %vm269, %v739, 0
        %v758 = vsel %vm273, %v753, 0
        %v760 = vsel %vm273, %v754, 0
        %762 = vmatpush.msra.mxu0 0.0
        %763 = vmatpush.msra.mxu0 0.0
        %764 = vmatpush.msra.mxu0 0.0
        %765 = vmatpush.msra.mxu0 0.0
        %766 = vmatpush.msra.mxu0 0.0
        %767 = vmatpush.msra.mxu0 0.0
        %768 = vmatpush.msra.mxu0 0.0
        %769 = vmatpush.msra.mxu0 0.0
        %770 = vmatpush.msra.mxu0 0.0
        %771 = vmatpush.msra.mxu0 0.0
        %772 = vmatpush.msra.mxu0 0.0
        %773 = vmatpush.msra.mxu0 0.0
        %774 = vmatpush.msra.mxu0 0.0
        %775 = vmatpush.msra.mxu0 0.0
        %776 = vmatpush.msra.mxu0 0.0
        %777 = vmatpush.msra.mxu0 %v758
        %778 = vmatmul.f32.gmra.mxu0 %v756
        %v779 = vpop.f32.mrf.mxu0
        %v780 = vadd.f32 0.0, %v779
        %781 = vdwg.mxu0
        %782 = vmatpush.msra.mxu0 0.0
        %783 = vmatpush.msra.mxu0 0.0
        %784 = vmatpush.msra.mxu0 0.0
        %785 = vmatpush.msra.mxu0 0.0
        %786 = vmatpush.msra.mxu0 0.0
        %787 = vmatpush.msra.mxu0 0.0
        %788 = vmatpush.msra.mxu0 0.0
        %789 = vmatpush.msra.mxu0 0.0
        %790 = vmatpush.msra.mxu0 0.0
        %791 = vmatpush.msra.mxu0 0.0
        %792 = vmatpush.msra.mxu0 0.0
        %793 = vmatpush.msra.mxu0 0.0
        %794 = vmatpush.msra.mxu0 0.0
        %795 = vmatpush.msra.mxu0 0.0
        %796 = vmatpush.msra.mxu0 0.0
        %797 = vmatpush.msra.mxu0 %v760
        %798 = vmatmul.f32.gmra.mxu0 %v756
        %v799 = vpop.f32.mrf.mxu0
        %v800 = vadd.f32 0.0, %v799
        %801 = vdwg.mxu0
        %v802 = vadd.f32 %v736, %v780
        %v803 = vadd.f32 %v737, %v800
        %s804 = scalar_lea.vmem %s1, 64
        %v805 = vld [vmem:[%s804] sm:$0xff]
        %806 = vst [vmem:[#allocation1] ss:$2 sm:$0xff] %v222
        %s807 = scalar_lea.vmem [#allocation1], 16
        %808 = vst [vmem:[%s807] ss:$2 sm:$0xff] %v223
        %v809 = vld.sshfl [vmem:[#allocation1] sm:$0xff pattern:$0x75316420]
        %v810 = vld.sshfl [vmem:[#allocation1 + $0x8] sm:$0xff pattern:$0x75316420]
        %v811 = vld.sshfl [vmem:[#allocation1 + $0x10] sm:$0xff pattern:$0x75316420]
        %812 = vrot.lane.b32.xlu0 %v809, 79
        %v813 = vpop.permute.xlu0 %812
        %814 = vrot.lane.b32.xlu0 %v810, 79
        %v815 = vpop.permute.xlu0 %814
        %816 = vrot.lane.b32.xlu0 %v811, 79
        %v817 = vpop.permute.xlu0 %816
        %vm818 = vcmask 646144
        %v819 = vsel %vm818, %v813, %v815
        %v820 = vsel %vm818, %v815, %v817
        %v822 = vsel %vm269, %v805, 0
        %v824 = vsel %vm273, %v819, 0
        %v826 = vsel %vm273, %v820, 0
        %828 = vmatpush.msra.mxu0 0.0
        %829 = vmatpush.msra.mxu0 0.0
        %830 = vmatpush.msra.mxu0 0.0
        %831 = vmatpush.msra.mxu0 0.0
        %832 = vmatpush.msra.mxu0 0.0
        %833 = vmatpush.msra.mxu0 0.0
        %834 = vmatpush.msra.mxu0 0.0
        %835 = vmatpush.msra.mxu0 0.0
        %836 = vmatpush.msra.mxu0 0.0
        %837 = vmatpush.msra.mxu0 0.0
        %838 = vmatpush.msra.mxu0 0.0
        %839 = vmatpush.msra.mxu0 0.0
        %840 = vmatpush.msra.mxu0 0.0
        %841 = vmatpush.msra.mxu0 0.0
        %842 = vmatpush.msra.mxu0 0.0
        %843 = vmatpush.msra.mxu0 %v824
        %844 = vmatmul.f32.gmra.mxu0 %v822
        %v845 = vpop.f32.mrf.mxu0
        %v846 = vadd.f32 0.0, %v845
        %847 = vdwg.mxu0
        %848 = vmatpush.msra.mxu0 0.0
        %849 = vmatpush.msra.mxu0 0.0
        %850 = vmatpush.msra.mxu0 0.0
        %851 = vmatpush.msra.mxu0 0.0
        %852 = vmatpush.msra.mxu0 0.0
        %853 = vmatpush.msra.mxu0 0.0
        %854 = vmatpush.msra.mxu0 0.0
        %855 = vmatpush.msra.mxu0 0.0
        %856 = vmatpush.msra.mxu0 0.0
        %857 = vmatpush.msra.mxu0 0.0
        %858 = vmatpush.msra.mxu0 0.0
        %859 = vmatpush.msra.mxu0 0.0
        %860 = vmatpush.msra.mxu0 0.0
        %861 = vmatpush.msra.mxu0 0.0
        %862 = vmatpush.msra.mxu0 0.0
        %863 = vmatpush.msra.mxu0 %v826
        %864 = vmatmul.f32.gmra.mxu0 %v822
        %v865 = vpop.f32.mrf.mxu0
        %v866 = vadd.f32 0.0, %v865
        %867 = vdwg.mxu0
        %v868 = vsel %vm462, %v846, 0.0
        %v869 = vsel %vm463, %v866, 0.0
        %v870 = vadd.f32 %v802, %v868
        %v871 = vadd.f32 %v803, %v869
        %v872 = vld [vmem:[%s2] sm:$0xff]
        %874 = vset.pattern.permute.xlu0 0
        %875 = vperm.xlu0 %874, %v872
        %v876 = vpop.permute.xlu0 %875
        %v878 = vadd.f32 %v870, %v876
        %v879 = vadd.f32 %v871, %v876
        %v880 = vmax.f32 %v878, 0.0
        %v881 = vmax.f32 %v879, 0.0
        %v884 = vrot.slane %v881, 7
        %vm885 = vcmask 1040384
        %v886 = vsel %vm885, %v880, %v884
        %v888 = vlaneseq
        %vm889 = vcmp.ge.s32.totalorder %v888, 0
        %vm890 = vcmp.lt.s32.totalorder %v888, 256
        %vm891 = vmand %vm889, %vm890
        %892 = vst.msk [vmem:[#allocation2] sm:$0x3] %vm891, %v886
        %893 = vst [vmem:[#allocation1] sm:$0xff] %v880
        %894 = vst [vmem:[#allocation1 + $0x9] sm:$0xff] %v881
        %s895 = scalar_lea.vmem [#allocation1], 1
        %v896 = vld [vmem:[%s895] ss:$9 sm:$0xff]
        %898 = vst.msk [vmem:[#allocation2 + $0x2] sm:$0x3] %vm891, %v896
        %899 = vst [vmem:[#allocation1] sm:$0xff] %v880
        %900 = vst [vmem:[#allocation1 + $0x9] sm:$0xff] %v881
        %s901 = scalar_lea.vmem [#allocation1], 2
        %v902 = vld [vmem:[%s901] ss:$9 sm:$0xff]
        %904 = vst.msk [vmem:[#allocation2 + $0x4] sm:$0x3] %vm891, %v902
        %905 = vst [vmem:[#allocation1] sm:$0xff] %v880
        %906 = vst [vmem:[#allocation1 + $0x9] sm:$0xff] %v881
        %s907 = scalar_lea.vmem [#allocation1], 3
        %v908 = vld [vmem:[%s907] ss:$9 sm:$0xff]
        %910 = vst.msk [vmem:[#allocation2 + $0x6] sm:$0x3] %vm891, %v908
        %911 = vst [vmem:[#allocation1] sm:$0xff] %v880
        %912 = vst [vmem:[#allocation1 + $0x9] sm:$0xff] %v881
        %s913 = scalar_lea.vmem [#allocation1], 4
        %v914 = vld [vmem:[%s913] ss:$9 sm:$0xff]
        %916 = vst.msk [vmem:[#allocation2 + $0x8] sm:$0x3] %vm891, %v914
        %917 = vst [vmem:[#allocation1] sm:$0xff] %v880
        %918 = vst [vmem:[#allocation1 + $0x9] sm:$0xff] %v881
        %s919 = scalar_lea.vmem [#allocation1], 5
        %v920 = vld [vmem:[%s919] ss:$9 sm:$0xff]
        %922 = vst.msk [vmem:[#allocation2 + $0xa] sm:$0x3] %vm891, %v920
        %923 = vst [vmem:[#allocation1] sm:$0xff] %v880
        %924 = vst [vmem:[#allocation1 + $0x9] sm:$0xff] %v881
        %s925 = scalar_lea.vmem [#allocation1], 6
        %v926 = vld [vmem:[%s925] ss:$9 sm:$0xff]
        %928 = vst.msk [vmem:[#allocation2 + $0xc] sm:$0x3] %vm891, %v926
        %929 = vst [vmem:[#allocation1] sm:$0xff] %v880
        %930 = vst [vmem:[#allocation1 + $0x9] sm:$0xff] %v881
        %s931 = scalar_lea.vmem [#allocation1], 7
        %v932 = vld [vmem:[%s931] ss:$9 sm:$0xff]
        %934 = vst.msk [vmem:[#allocation2 + $0xe] sm:$0x3] %vm891, %v932
        %v935 = vld [vmem:[#allocation2] sm:$0xff]
        %v936 = vld [vmem:[#allocation2 + $0x8] sm:$0xff]
        %v937 = vld [vmem:[%s3] sm:$0xff]
        %v938 = vld [vmem:[%s3 + $0x8] sm:$0xff]
        %v939 = vld [vmem:[%s3 + $0x10] sm:$0xff]
        %v940 = vld [vmem:[%s3 + $0x18] sm:$0xff]
        %v941 = vld [vmem:[%s3 + $0x20] sm:$0xff]
        %v942 = vld [vmem:[%s3 + $0x28] sm:$0xff]
        %v943 = vld [vmem:[%s3 + $0x30] sm:$0xff]
        %v944 = vld [vmem:[%s3 + $0x38] sm:$0xff]
        %v945 = vld [vmem:[%s3 + $0x40] sm:$0xff]
        %v946 = vld [vmem:[%s3 + $0x48] sm:$0xff]
        %v947 = vld [vmem:[%s3 + $0x50] sm:$0xff]
        %v948 = vld [vmem:[%s3 + $0x58] sm:$0xff]
        %v949 = vld [vmem:[%s3 + $0x60] sm:$0xff]
        %v950 = vld [vmem:[%s3 + $0x68] sm:$0xff]
        %v951 = vld [vmem:[%s3 + $0x70] sm:$0xff]
        %v952 = vld [vmem:[%s3 + $0x78] sm:$0xff]
        %v953 = vld [vmem:[%s3 + $0x80] sm:$0xff]
        %v954 = vld [vmem:[%s3 + $0x88] sm:$0xff]
        %v955 = vld [vmem:[%s3 + $0x90] sm:$0xff]
        %v956 = vld [vmem:[%s3 + $0x98] sm:$0xff]
        %v957 = vld [vmem:[%s3 + $0xa0] sm:$0xff]
        %v958 = vld [vmem:[%s3 + $0xa8] sm:$0xff]
        %v959 = vld [vmem:[%s3 + $0xb0] sm:$0xff]
        %v960 = vld [vmem:[%s3 + $0xb8] sm:$0xff]
        %v961 = vld [vmem:[%s3 + $0xc0] sm:$0xff]
        %v962 = vld [vmem:[%s3 + $0xc8] sm:$0xff]
        %v963 = vld [vmem:[%s3 + $0xd0] sm:$0xff]
        %v964 = vld [vmem:[%s3 + $0xd8] sm:$0xff]
        %v965 = vld [vmem:[%s3 + $0xe0] sm:$0xff]
        %v966 = vld [vmem:[%s3 + $0xe8] sm:$0xff]
        %v967 = vld [vmem:[%s3 + $0xf0] sm:$0xff]
        %v968 = vld [vmem:[%s3 + $0xf8] sm:$0xff]
        %v969 = vld [vmem:[%s3 + $0x100] sm:$0xff]
        %v970 = vld [vmem:[%s3 + $0x108] sm:$0xff]
        %v971 = vld [vmem:[%s3 + $0x110] sm:$0xff]
        %v972 = vld [vmem:[%s3 + $0x118] sm:$0xff]
        %v973 = vld [vmem:[%s3 + $0x120] sm:$0xff]
        %v974 = vld [vmem:[%s3 + $0x128] sm:$0xff]
        %v975 = vld [vmem:[%s3 + $0x130] sm:$0xff]
        %v976 = vld [vmem:[%s3 + $0x138] sm:$0xff]
        %v977 = vld [vmem:[%s3 + $0x140] sm:$0xff]
        %v978 = vld [vmem:[%s3 + $0x148] sm:$0xff]
        %v979 = vld [vmem:[%s3 + $0x150] sm:$0xff]
        %v980 = vld [vmem:[%s3 + $0x158] sm:$0xff]
        %v981 = vld [vmem:[%s3 + $0x160] sm:$0xff]
        %v982 = vld [vmem:[%s3 + $0x168] sm:$0xff]
        %v983 = vld [vmem:[%s3 + $0x170] sm:$0xff]
        %v984 = vld [vmem:[%s3 + $0x178] sm:$0xff]
        %v985 = vld [vmem:[%s3 + $0x180] sm:$0xff]
        %v986 = vld [vmem:[%s3 + $0x188] sm:$0xff]
        %v987 = vld [vmem:[%s3 + $0x190] sm:$0xff]
        %v988 = vld [vmem:[%s3 + $0x198] sm:$0xff]
        %v989 = vld [vmem:[%s3 + $0x1a0] sm:$0xff]
        %v990 = vld [vmem:[%s3 + $0x1a8] sm:$0xff]
        %v991 = vld [vmem:[%s3 + $0x1b0] sm:$0xff]
        %v992 = vld [vmem:[%s3 + $0x1b8] sm:$0xff]
        %v993 = vld [vmem:[%s3 + $0x1c0] sm:$0xff]
        %v994 = vld [vmem:[%s3 + $0x1c8] sm:$0xff]
        %v995 = vld [vmem:[%s3 + $0x1d0] sm:$0xff]
        %v996 = vld [vmem:[%s3 + $0x1d8] sm:$0xff]
        %v997 = vld [vmem:[%s3 + $0x1e0] sm:$0xff]
        %v998 = vld [vmem:[%s3 + $0x1e8] sm:$0xff]
        %v999 = vld [vmem:[%s3 + $0x1f0] sm:$0xff]
        %v1000 = vld [vmem:[%s3 + $0x1f8] sm:$0xff]
        %v1001 = vld [vmem:[%s3 + $0x200] sm:$0xff]
        %v1002 = vld [vmem:[%s3 + $0x208] sm:$0xff]
        %v1003 = vld [vmem:[%s3 + $0x210] sm:$0xff]
        %v1004 = vld [vmem:[%s3 + $0x218] sm:$0xff]
        %v1005 = vld [vmem:[%s3 + $0x220] sm:$0xff]
        %v1006 = vld [vmem:[%s3 + $0x228] sm:$0xff]
        %v1007 = vld [vmem:[%s3 + $0x230] sm:$0xff]
        %v1008 = vld [vmem:[%s3 + $0x238] sm:$0xff]
        %v1009 = vld [vmem:[%s3 + $0x240] sm:$0xff]
        %v1010 = vld [vmem:[%s3 + $0x248] sm:$0xff]
        %v1011 = vld [vmem:[%s3 + $0x250] sm:$0xff]
        %v1012 = vld [vmem:[%s3 + $0x258] sm:$0xff]
        %v1013 = vld [vmem:[%s3 + $0x260] sm:$0xff]
        %v1014 = vld [vmem:[%s3 + $0x268] sm:$0xff]
        %v1015 = vld [vmem:[%s3 + $0x270] sm:$0xff]
        %v1016 = vld [vmem:[%s3 + $0x278] sm:$0xff]
        %v1017 = vld [vmem:[%s3 + $0x280] sm:$0xff]
        %v1018 = vld [vmem:[%s3 + $0x288] sm:$0xff]
        %v1019 = vld [vmem:[%s3 + $0x290] sm:$0xff]
        %v1020 = vld [vmem:[%s3 + $0x298] sm:$0xff]
        %v1021 = vld [vmem:[%s3 + $0x2a0] sm:$0xff]
        %v1022 = vld [vmem:[%s3 + $0x2a8] sm:$0xff]
        %v1023 = vld [vmem:[%s3 + $0x2b0] sm:$0xff]
        %v1024 = vld [vmem:[%s3 + $0x2b8] sm:$0xff]
        %v1025 = vld [vmem:[%s3 + $0x2c0] sm:$0xff]
        %v1026 = vld [vmem:[%s3 + $0x2c8] sm:$0xff]
        %v1027 = vld [vmem:[%s3 + $0x2d0] sm:$0xff]
        %v1028 = vld [vmem:[%s3 + $0x2d8] sm:$0xff]
        %v1029 = vld [vmem:[%s3 + $0x2e0] sm:$0xff]
        %v1030 = vld [vmem:[%s3 + $0x2e8] sm:$0xff]
        %v1031 = vld [vmem:[%s3 + $0x2f0] sm:$0xff]
        %v1032 = vld [vmem:[%s3 + $0x2f8] sm:$0xff]
        %v1033 = vld [vmem:[%s3 + $0x300] sm:$0xff]
        %v1034 = vld [vmem:[%s3 + $0x308] sm:$0xff]
        %v1035 = vld [vmem:[%s3 + $0x310] sm:$0xff]
        %v1036 = vld [vmem:[%s3 + $0x318] sm:$0xff]
        %v1037 = vld [vmem:[%s3 + $0x320] sm:$0xff]
        %v1038 = vld [vmem:[%s3 + $0x328] sm:$0xff]
        %v1039 = vld [vmem:[%s3 + $0x330] sm:$0xff]
        %v1040 = vld [vmem:[%s3 + $0x338] sm:$0xff]
        %v1041 = vld [vmem:[%s3 + $0x340] sm:$0xff]
        %v1042 = vld [vmem:[%s3 + $0x348] sm:$0xff]
        %v1043 = vld [vmem:[%s3 + $0x350] sm:$0xff]
        %v1044 = vld [vmem:[%s3 + $0x358] sm:$0xff]
        %v1045 = vld [vmem:[%s3 + $0x360] sm:$0xff]
        %v1046 = vld [vmem:[%s3 + $0x368] sm:$0xff]
        %v1047 = vld [vmem:[%s3 + $0x370] sm:$0xff]
        %v1048 = vld [vmem:[%s3 + $0x378] sm:$0xff]
        %v1049 = vld [vmem:[%s3 + $0x380] sm:$0xff]
        %v1050 = vld [vmem:[%s3 + $0x388] sm:$0xff]
        %v1051 = vld [vmem:[%s3 + $0x390] sm:$0xff]
        %v1052 = vld [vmem:[%s3 + $0x398] sm:$0xff]
        %v1053 = vld [vmem:[%s3 + $0x3a0] sm:$0xff]
        %v1054 = vld [vmem:[%s3 + $0x3a8] sm:$0xff]
        %v1055 = vld [vmem:[%s3 + $0x3b0] sm:$0xff]
        %v1056 = vld [vmem:[%s3 + $0x3b8] sm:$0xff]
        %v1057 = vld [vmem:[%s3 + $0x3c0] sm:$0xff]
        %v1058 = vld [vmem:[%s3 + $0x3c8] sm:$0xff]
        %v1059 = vld [vmem:[%s3 + $0x3d0] sm:$0xff]
        %v1060 = vld [vmem:[%s3 + $0x3d8] sm:$0xff]
        %v1061 = vld [vmem:[%s3 + $0x3e0] sm:$0xff]
        %v1062 = vld [vmem:[%s3 + $0x3e8] sm:$0xff]
        %v1063 = vld [vmem:[%s3 + $0x3f0] sm:$0xff]
        %v1064 = vld [vmem:[%s3 + $0x3f8] sm:$0xff]
        %v1065 = vld [vmem:[%s3 + $0x400] sm:$0xff]
        %v1066 = vld [vmem:[%s3 + $0x408] sm:$0xff]
        %v1067 = vld [vmem:[%s3 + $0x410] sm:$0xff]
        %v1068 = vld [vmem:[%s3 + $0x418] sm:$0xff]
        %v1069 = vld [vmem:[%s3 + $0x420] sm:$0xff]
        %v1070 = vld [vmem:[%s3 + $0x428] sm:$0xff]
        %v1071 = vld [vmem:[%s3 + $0x430] sm:$0xff]
        %v1072 = vld [vmem:[%s3 + $0x438] sm:$0xff]
        %v1073 = vld [vmem:[%s3 + $0x440] sm:$0xff]
        %v1074 = vld [vmem:[%s3 + $0x448] sm:$0xff]
        %v1075 = vld [vmem:[%s3 + $0x450] sm:$0xff]
        %v1076 = vld [vmem:[%s3 + $0x458] sm:$0xff]
        %v1077 = vld [vmem:[%s3 + $0x460] sm:$0xff]
        %v1078 = vld [vmem:[%s3 + $0x468] sm:$0xff]
        %v1079 = vld [vmem:[%s3 + $0x470] sm:$0xff]
        %v1080 = vld [vmem:[%s3 + $0x478] sm:$0xff]
        %v1081 = vld [vmem:[%s3 + $0x480] sm:$0xff]
        %v1082 = vld [vmem:[%s3 + $0x488] sm:$0xff]
        %v1083 = vld [vmem:[%s3 + $0x490] sm:$0xff]
        %v1084 = vld [vmem:[%s3 + $0x498] sm:$0xff]
        %v1085 = vld [vmem:[%s3 + $0x4a0] sm:$0xff]
        %v1086 = vld [vmem:[%s3 + $0x4a8] sm:$0xff]
        %v1087 = vld [vmem:[%s3 + $0x4b0] sm:$0xff]
        %v1088 = vld [vmem:[%s3 + $0x4b8] sm:$0xff]
        %v1089 = vld [vmem:[%s3 + $0x4c0] sm:$0xff]
        %v1090 = vld [vmem:[%s3 + $0x4c8] sm:$0xff]
        %v1091 = vld [vmem:[%s3 + $0x4d0] sm:$0xff]
        %v1092 = vld [vmem:[%s3 + $0x4d8] sm:$0xff]
        %v1093 = vld [vmem:[%s3 + $0x4e0] sm:$0xff]
        %v1094 = vld [vmem:[%s3 + $0x4e8] sm:$0xff]
        %v1095 = vld [vmem:[%s3 + $0x4f0] sm:$0xff]
        %v1096 = vld [vmem:[%s3 + $0x4f8] sm:$0xff]
        %v1097 = vld [vmem:[%s3 + $0x500] sm:$0xff]
        %v1098 = vld [vmem:[%s3 + $0x508] sm:$0xff]
        %v1099 = vld [vmem:[%s3 + $0x510] sm:$0xff]
        %v1100 = vld [vmem:[%s3 + $0x518] sm:$0xff]
        %v1101 = vld [vmem:[%s3 + $0x520] sm:$0xff]
        %v1102 = vld [vmem:[%s3 + $0x528] sm:$0xff]
        %v1103 = vld [vmem:[%s3 + $0x530] sm:$0xff]
        %v1104 = vld [vmem:[%s3 + $0x538] sm:$0xff]
        %v1105 = vld [vmem:[%s3 + $0x540] sm:$0xff]
        %v1106 = vld [vmem:[%s3 + $0x548] sm:$0xff]
        %v1107 = vld [vmem:[%s3 + $0x550] sm:$0xff]
        %v1108 = vld [vmem:[%s3 + $0x558] sm:$0xff]
        %v1109 = vld [vmem:[%s3 + $0x560] sm:$0xff]
        %v1110 = vld [vmem:[%s3 + $0x568] sm:$0xff]
        %v1111 = vld [vmem:[%s3 + $0x570] sm:$0xff]
        %v1112 = vld [vmem:[%s3 + $0x578] sm:$0xff]
        %v1113 = vld [vmem:[%s3 + $0x580] sm:$0xff]
        %v1114 = vld [vmem:[%s3 + $0x588] sm:$0xff]
        %v1115 = vld [vmem:[%s3 + $0x590] sm:$0xff]
        %v1116 = vld [vmem:[%s3 + $0x598] sm:$0xff]
        %v1117 = vld [vmem:[%s3 + $0x5a0] sm:$0xff]
        %v1118 = vld [vmem:[%s3 + $0x5a8] sm:$0xff]
        %v1119 = vld [vmem:[%s3 + $0x5b0] sm:$0xff]
        %v1120 = vld [vmem:[%s3 + $0x5b8] sm:$0xff]
        %v1121 = vld [vmem:[%s3 + $0x5c0] sm:$0xff]
        %v1122 = vld [vmem:[%s3 + $0x5c8] sm:$0xff]
        %v1123 = vld [vmem:[%s3 + $0x5d0] sm:$0xff]
        %v1124 = vld [vmem:[%s3 + $0x5d8] sm:$0xff]
        %v1125 = vld [vmem:[%s3 + $0x5e0] sm:$0xff]
        %v1126 = vld [vmem:[%s3 + $0x5e8] sm:$0xff]
        %v1127 = vld [vmem:[%s3 + $0x5f0] sm:$0xff]
        %v1128 = vld [vmem:[%s3 + $0x5f8] sm:$0xff]
        %v1129 = vld [vmem:[%s3 + $0x600] sm:$0xff]
        %v1130 = vld [vmem:[%s3 + $0x608] sm:$0xff]
        %v1131 = vld [vmem:[%s3 + $0x610] sm:$0xff]
        %v1132 = vld [vmem:[%s3 + $0x618] sm:$0xff]
        %v1133 = vld [vmem:[%s3 + $0x620] sm:$0xff]
        %v1134 = vld [vmem:[%s3 + $0x628] sm:$0xff]
        %v1135 = vld [vmem:[%s3 + $0x630] sm:$0xff]
        %v1136 = vld [vmem:[%s3 + $0x638] sm:$0xff]
        %v1137 = vld [vmem:[%s3 + $0x640] sm:$0xff]
        %v1138 = vld [vmem:[%s3 + $0x648] sm:$0xff]
        %v1139 = vld [vmem:[%s3 + $0x650] sm:$0xff]
        %v1140 = vld [vmem:[%s3 + $0x658] sm:$0xff]
        %v1141 = vld [vmem:[%s3 + $0x660] sm:$0xff]
        %v1142 = vld [vmem:[%s3 + $0x668] sm:$0xff]
        %v1143 = vld [vmem:[%s3 + $0x670] sm:$0xff]
        %v1144 = vld [vmem:[%s3 + $0x678] sm:$0xff]
        %v1145 = vld [vmem:[%s3 + $0x680] sm:$0xff]
        %v1146 = vld [vmem:[%s3 + $0x688] sm:$0xff]
        %v1147 = vld [vmem:[%s3 + $0x690] sm:$0xff]
        %v1148 = vld [vmem:[%s3 + $0x698] sm:$0xff]
        %v1149 = vld [vmem:[%s3 + $0x6a0] sm:$0xff]
        %v1150 = vld [vmem:[%s3 + $0x6a8] sm:$0xff]
        %v1151 = vld [vmem:[%s3 + $0x6b0] sm:$0xff]
        %v1152 = vld [vmem:[%s3 + $0x6b8] sm:$0xff]
        %v1153 = vld [vmem:[%s3 + $0x6c0] sm:$0xff]
        %v1154 = vld [vmem:[%s3 + $0x6c8] sm:$0xff]
        %v1155 = vld [vmem:[%s3 + $0x6d0] sm:$0xff]
        %v1156 = vld [vmem:[%s3 + $0x6d8] sm:$0xff]
        %v1157 = vld [vmem:[%s3 + $0x6e0] sm:$0xff]
        %v1158 = vld [vmem:[%s3 + $0x6e8] sm:$0xff]
        %v1159 = vld [vmem:[%s3 + $0x6f0] sm:$0xff]
        %v1160 = vld [vmem:[%s3 + $0x6f8] sm:$0xff]
        %v1161 = vld [vmem:[%s3 + $0x700] sm:$0xff]
        %v1162 = vld [vmem:[%s3 + $0x708] sm:$0xff]
        %v1163 = vld [vmem:[%s3 + $0x710] sm:$0xff]
        %v1164 = vld [vmem:[%s3 + $0x718] sm:$0xff]
        %v1165 = vld [vmem:[%s3 + $0x720] sm:$0xff]
        %v1166 = vld [vmem:[%s3 + $0x728] sm:$0xff]
        %v1167 = vld [vmem:[%s3 + $0x730] sm:$0xff]
        %v1168 = vld [vmem:[%s3 + $0x738] sm:$0xff]
        %v1169 = vld [vmem:[%s3 + $0x740] sm:$0xff]
        %v1170 = vld [vmem:[%s3 + $0x748] sm:$0xff]
        %v1171 = vld [vmem:[%s3 + $0x750] sm:$0xff]
        %v1172 = vld [vmem:[%s3 + $0x758] sm:$0xff]
        %v1173 = vld [vmem:[%s3 + $0x760] sm:$0xff]
        %v1174 = vld [vmem:[%s3 + $0x768] sm:$0xff]
        %v1175 = vld [vmem:[%s3 + $0x770] sm:$0xff]
        %v1176 = vld [vmem:[%s3 + $0x778] sm:$0xff]
        %v1177 = vld [vmem:[%s3 + $0x780] sm:$0xff]
        %v1178 = vld [vmem:[%s3 + $0x788] sm:$0xff]
        %v1179 = vld [vmem:[%s3 + $0x790] sm:$0xff]
        %v1180 = vld [vmem:[%s3 + $0x798] sm:$0xff]
        %v1181 = vld [vmem:[%s3 + $0x7a0] sm:$0xff]
        %v1182 = vld [vmem:[%s3 + $0x7a8] sm:$0xff]
        %v1183 = vld [vmem:[%s3 + $0x7b0] sm:$0xff]
        %v1184 = vld [vmem:[%s3 + $0x7b8] sm:$0xff]
        %v1185 = vld [vmem:[%s3 + $0x7c0] sm:$0xff]
        %v1186 = vld [vmem:[%s3 + $0x7c8] sm:$0xff]
        %v1187 = vld [vmem:[%s3 + $0x7d0] sm:$0xff]
        %v1188 = vld [vmem:[%s3 + $0x7d8] sm:$0xff]
        %v1189 = vld [vmem:[%s3 + $0x7e0] sm:$0xff]
        %v1190 = vld [vmem:[%s3 + $0x7e8] sm:$0xff]
        %v1191 = vld [vmem:[%s3 + $0x7f0] sm:$0xff]
        %v1192 = vld [vmem:[%s3 + $0x7f8] sm:$0xff]
        %v1193 = vld [vmem:[%s4] sm:$0x1]
        %v1196 = vperm.slane %v935, 0
        %v1197 = vperm.slane %v935, 1
        %v1198 = vperm.slane %v935, 2
        %v1199 = vperm.slane %v935, 3
        %v1200 = vperm.slane %v935, 4
        %v1201 = vperm.slane %v935, 5
        %v1202 = vperm.slane %v935, 6
        %v1203 = vperm.slane %v935, 7
        %v1204 = vperm.slane %v936, 0
        %v1205 = vperm.slane %v936, 1
        %v1206 = vperm.slane %v936, 2
        %v1207 = vperm.slane %v936, 3
        %v1208 = vperm.slane %v936, 4
        %v1209 = vperm.slane %v936, 5
        %v1210 = vperm.slane %v936, 6
        %v1211 = vperm.slane %v936, 7
        %1228 = vmatpush.msra.mxu0 %v952
        %1229 = vmatpush.msra.mxu0 %v951
        %1230 = vmatpush.msra.mxu0 %v950
        %1231 = vmatpush.msra.mxu0 %v949
        %1232 = vmatpush.msra.mxu0 %v948
        %1233 = vmatpush.msra.mxu0 %v947
        %1234 = vmatpush.msra.mxu0 %v946
        %1235 = vmatpush.msra.mxu0 %v945
        %1236 = vmatpush.msra.mxu0 %v944
        %1237 = vmatpush.msra.mxu0 %v943
        %1238 = vmatpush.msra.mxu0 %v942
        %1239 = vmatpush.msra.mxu0 %v941
        %1240 = vmatpush.msra.mxu0 %v940
        %1241 = vmatpush.msra.mxu0 %v939
        %1242 = vmatpush.msra.mxu0 %v938
        %1243 = vmatpush.msra.mxu0 %v937
        %1244 = vmatmul.f32.gmra.mxu0 %v1196
        %v1245 = vpop.f32.mrf.mxu0
        %v1246 = vadd.f32 %v1193, %v1245
        %1247 = vdwg.mxu0
        %1248 = vmatpush.msra.mxu0 %v968
        %1249 = vmatpush.msra.mxu0 %v967
        %1250 = vmatpush.msra.mxu0 %v966
        %1251 = vmatpush.msra.mxu0 %v965
        %1252 = vmatpush.msra.mxu0 %v964
        %1253 = vmatpush.msra.mxu0 %v963
        %1254 = vmatpush.msra.mxu0 %v962
        %1255 = vmatpush.msra.mxu0 %v961
        %1256 = vmatpush.msra.mxu0 %v960
        %1257 = vmatpush.msra.mxu0 %v959
        %1258 = vmatpush.msra.mxu0 %v958
        %1259 = vmatpush.msra.mxu0 %v957
        %1260 = vmatpush.msra.mxu0 %v956
        %1261 = vmatpush.msra.mxu0 %v955
        %1262 = vmatpush.msra.mxu0 %v954
        %1263 = vmatpush.msra.mxu0 %v953
        %1264 = vmatmul.f32.gmra.mxu0 %v1197
        %v1265 = vpop.f32.mrf.mxu0
        %v1266 = vadd.f32 %v1246, %v1265
        %1267 = vdwg.mxu0
        %1268 = vmatpush.msra.mxu0 %v984
        %1269 = vmatpush.msra.mxu0 %v983
        %1270 = vmatpush.msra.mxu0 %v982
        %1271 = vmatpush.msra.mxu0 %v981
        %1272 = vmatpush.msra.mxu0 %v980
        %1273 = vmatpush.msra.mxu0 %v979
        %1274 = vmatpush.msra.mxu0 %v978
        %1275 = vmatpush.msra.mxu0 %v977
        %1276 = vmatpush.msra.mxu0 %v976
        %1277 = vmatpush.msra.mxu0 %v975
        %1278 = vmatpush.msra.mxu0 %v974
        %1279 = vmatpush.msra.mxu0 %v973
        %1280 = vmatpush.msra.mxu0 %v972
        %1281 = vmatpush.msra.mxu0 %v971
        %1282 = vmatpush.msra.mxu0 %v970
        %1283 = vmatpush.msra.mxu0 %v969
        %1284 = vmatmul.f32.gmra.mxu0 %v1198
        %v1285 = vpop.f32.mrf.mxu0
        %v1286 = vadd.f32 %v1266, %v1285
        %1287 = vdwg.mxu0
        %1288 = vmatpush.msra.mxu0 %v1000
        %1289 = vmatpush.msra.mxu0 %v999
        %1290 = vmatpush.msra.mxu0 %v998
        %1291 = vmatpush.msra.mxu0 %v997
        %1292 = vmatpush.msra.mxu0 %v996
        %1293 = vmatpush.msra.mxu0 %v995
        %1294 = vmatpush.msra.mxu0 %v994
        %1295 = vmatpush.msra.mxu0 %v993
        %1296 = vmatpush.msra.mxu0 %v992
        %1297 = vmatpush.msra.mxu0 %v991
        %1298 = vmatpush.msra.mxu0 %v990
        %1299 = vmatpush.msra.mxu0 %v989
        %1300 = vmatpush.msra.mxu0 %v988
        %1301 = vmatpush.msra.mxu0 %v987
        %1302 = vmatpush.msra.mxu0 %v986
        %1303 = vmatpush.msra.mxu0 %v985
        %1304 = vmatmul.f32.gmra.mxu0 %v1199
        %v1305 = vpop.f32.mrf.mxu0
        %v1306 = vadd.f32 %v1286, %v1305
        %1307 = vdwg.mxu0
        %1308 = vmatpush.msra.mxu0 %v1016
        %1309 = vmatpush.msra.mxu0 %v1015
        %1310 = vmatpush.msra.mxu0 %v1014
        %1311 = vmatpush.msra.mxu0 %v1013
        %1312 = vmatpush.msra.mxu0 %v1012
        %1313 = vmatpush.msra.mxu0 %v1011
        %1314 = vmatpush.msra.mxu0 %v1010
        %1315 = vmatpush.msra.mxu0 %v1009
        %1316 = vmatpush.msra.mxu0 %v1008
        %1317 = vmatpush.msra.mxu0 %v1007
        %1318 = vmatpush.msra.mxu0 %v1006
        %1319 = vmatpush.msra.mxu0 %v1005
        %1320 = vmatpush.msra.mxu0 %v1004
        %1321 = vmatpush.msra.mxu0 %v1003
        %1322 = vmatpush.msra.mxu0 %v1002
        %1323 = vmatpush.msra.mxu0 %v1001
        %1324 = vmatmul.f32.gmra.mxu0 %v1200
        %v1325 = vpop.f32.mrf.mxu0
        %v1326 = vadd.f32 %v1306, %v1325
        %1327 = vdwg.mxu0
        %1328 = vmatpush.msra.mxu0 %v1032
        %1329 = vmatpush.msra.mxu0 %v1031
        %1330 = vmatpush.msra.mxu0 %v1030
        %1331 = vmatpush.msra.mxu0 %v1029
        %1332 = vmatpush.msra.mxu0 %v1028
        %1333 = vmatpush.msra.mxu0 %v1027
        %1334 = vmatpush.msra.mxu0 %v1026
        %1335 = vmatpush.msra.mxu0 %v1025
        %1336 = vmatpush.msra.mxu0 %v1024
        %1337 = vmatpush.msra.mxu0 %v1023
        %1338 = vmatpush.msra.mxu0 %v1022
        %1339 = vmatpush.msra.mxu0 %v1021
        %1340 = vmatpush.msra.mxu0 %v1020
        %1341 = vmatpush.msra.mxu0 %v1019
        %1342 = vmatpush.msra.mxu0 %v1018
        %1343 = vmatpush.msra.mxu0 %v1017
        %1344 = vmatmul.f32.gmra.mxu0 %v1201
        %v1345 = vpop.f32.mrf.mxu0
        %v1346 = vadd.f32 %v1326, %v1345
        %1347 = vdwg.mxu0
        %1348 = vmatpush.msra.mxu0 %v1048
        %1349 = vmatpush.msra.mxu0 %v1047
        %1350 = vmatpush.msra.mxu0 %v1046
        %1351 = vmatpush.msra.mxu0 %v1045
        %1352 = vmatpush.msra.mxu0 %v1044
        %1353 = vmatpush.msra.mxu0 %v1043
        %1354 = vmatpush.msra.mxu0 %v1042
        %1355 = vmatpush.msra.mxu0 %v1041
        %1356 = vmatpush.msra.mxu0 %v1040
        %1357 = vmatpush.msra.mxu0 %v1039
        %1358 = vmatpush.msra.mxu0 %v1038
        %1359 = vmatpush.msra.mxu0 %v1037
        %1360 = vmatpush.msra.mxu0 %v1036
        %1361 = vmatpush.msra.mxu0 %v1035
        %1362 = vmatpush.msra.mxu0 %v1034
        %1363 = vmatpush.msra.mxu0 %v1033
        %1364 = vmatmul.f32.gmra.mxu0 %v1202
        %v1365 = vpop.f32.mrf.mxu0
        %v1366 = vadd.f32 %v1346, %v1365
        %1367 = vdwg.mxu0
        %1368 = vmatpush.msra.mxu0 %v1064
        %1369 = vmatpush.msra.mxu0 %v1063
        %1370 = vmatpush.msra.mxu0 %v1062
        %1371 = vmatpush.msra.mxu0 %v1061
        %1372 = vmatpush.msra.mxu0 %v1060
        %1373 = vmatpush.msra.mxu0 %v1059
        %1374 = vmatpush.msra.mxu0 %v1058
        %1375 = vmatpush.msra.mxu0 %v1057
        %1376 = vmatpush.msra.mxu0 %v1056
        %1377 = vmatpush.msra.mxu0 %v1055
        %1378 = vmatpush.msra.mxu0 %v1054
        %1379 = vmatpush.msra.mxu0 %v1053
        %1380 = vmatpush.msra.mxu0 %v1052
        %1381 = vmatpush.msra.mxu0 %v1051
        %1382 = vmatpush.msra.mxu0 %v1050
        %1383 = vmatpush.msra.mxu0 %v1049
        %1384 = vmatmul.f32.gmra.mxu0 %v1203
        %v1385 = vpop.f32.mrf.mxu0
        %v1386 = vadd.f32 %v1366, %v1385
        %1387 = vdwg.mxu0
        %1388 = vmatpush.msra.mxu0 %v1080
        %1389 = vmatpush.msra.mxu0 %v1079
        %1390 = vmatpush.msra.mxu0 %v1078
        %1391 = vmatpush.msra.mxu0 %v1077
        %1392 = vmatpush.msra.mxu0 %v1076
        %1393 = vmatpush.msra.mxu0 %v1075
        %1394 = vmatpush.msra.mxu0 %v1074
        %1395 = vmatpush.msra.mxu0 %v1073
        %1396 = vmatpush.msra.mxu0 %v1072
        %1397 = vmatpush.msra.mxu0 %v1071
        %1398 = vmatpush.msra.mxu0 %v1070
        %1399 = vmatpush.msra.mxu0 %v1069
        %1400 = vmatpush.msra.mxu0 %v1068
        %1401 = vmatpush.msra.mxu0 %v1067
        %1402 = vmatpush.msra.mxu0 %v1066
        %1403 = vmatpush.msra.mxu0 %v1065
        %1404 = vmatmul.f32.gmra.mxu0 %v1204
        %v1405 = vpop.f32.mrf.mxu0
        %v1406 = vadd.f32 %v1386, %v1405
        %1407 = vdwg.mxu0
        %1408 = vmatpush.msra.mxu0 %v1096
        %1409 = vmatpush.msra.mxu0 %v1095
        %1410 = vmatpush.msra.mxu0 %v1094
        %1411 = vmatpush.msra.mxu0 %v1093
        %1412 = vmatpush.msra.mxu0 %v1092
        %1413 = vmatpush.msra.mxu0 %v1091
        %1414 = vmatpush.msra.mxu0 %v1090
        %1415 = vmatpush.msra.mxu0 %v1089
        %1416 = vmatpush.msra.mxu0 %v1088
        %1417 = vmatpush.msra.mxu0 %v1087
        %1418 = vmatpush.msra.mxu0 %v1086
        %1419 = vmatpush.msra.mxu0 %v1085
        %1420 = vmatpush.msra.mxu0 %v1084
        %1421 = vmatpush.msra.mxu0 %v1083
        %1422 = vmatpush.msra.mxu0 %v1082
        %1423 = vmatpush.msra.mxu0 %v1081
        %1424 = vmatmul.f32.gmra.mxu0 %v1205
        %v1425 = vpop.f32.mrf.mxu0
        %v1426 = vadd.f32 %v1406, %v1425
        %1427 = vdwg.mxu0
        %1428 = vmatpush.msra.mxu0 %v1112
        %1429 = vmatpush.msra.mxu0 %v1111
        %1430 = vmatpush.msra.mxu0 %v1110
        %1431 = vmatpush.msra.mxu0 %v1109
        %1432 = vmatpush.msra.mxu0 %v1108
        %1433 = vmatpush.msra.mxu0 %v1107
        %1434 = vmatpush.msra.mxu0 %v1106
        %1435 = vmatpush.msra.mxu0 %v1105
        %1436 = vmatpush.msra.mxu0 %v1104
        %1437 = vmatpush.msra.mxu0 %v1103
        %1438 = vmatpush.msra.mxu0 %v1102
        %1439 = vmatpush.msra.mxu0 %v1101
        %1440 = vmatpush.msra.mxu0 %v1100
        %1441 = vmatpush.msra.mxu0 %v1099
        %1442 = vmatpush.msra.mxu0 %v1098
        %1443 = vmatpush.msra.mxu0 %v1097
        %1444 = vmatmul.f32.gmra.mxu0 %v1206
        %v1445 = vpop.f32.mrf.mxu0
        %v1446 = vadd.f32 %v1426, %v1445
        %1447 = vdwg.mxu0
        %1448 = vmatpush.msra.mxu0 %v1128
        %1449 = vmatpush.msra.mxu0 %v1127
        %1450 = vmatpush.msra.mxu0 %v1126
        %1451 = vmatpush.msra.mxu0 %v1125
        %1452 = vmatpush.msra.mxu0 %v1124
        %1453 = vmatpush.msra.mxu0 %v1123
        %1454 = vmatpush.msra.mxu0 %v1122
        %1455 = vmatpush.msra.mxu0 %v1121
        %1456 = vmatpush.msra.mxu0 %v1120
        %1457 = vmatpush.msra.mxu0 %v1119
        %1458 = vmatpush.msra.mxu0 %v1118
        %1459 = vmatpush.msra.mxu0 %v1117
        %1460 = vmatpush.msra.mxu0 %v1116
        %1461 = vmatpush.msra.mxu0 %v1115
        %1462 = vmatpush.msra.mxu0 %v1114
        %1463 = vmatpush.msra.mxu0 %v1113
        %1464 = vmatmul.f32.gmra.mxu0 %v1207
        %v1465 = vpop.f32.mrf.mxu0
        %v1466 = vadd.f32 %v1446, %v1465
        %1467 = vdwg.mxu0
        %1468 = vmatpush.msra.mxu0 %v1144
        %1469 = vmatpush.msra.mxu0 %v1143
        %1470 = vmatpush.msra.mxu0 %v1142
        %1471 = vmatpush.msra.mxu0 %v1141
        %1472 = vmatpush.msra.mxu0 %v1140
        %1473 = vmatpush.msra.mxu0 %v1139
        %1474 = vmatpush.msra.mxu0 %v1138
        %1475 = vmatpush.msra.mxu0 %v1137
        %1476 = vmatpush.msra.mxu0 %v1136
        %1477 = vmatpush.msra.mxu0 %v1135
        %1478 = vmatpush.msra.mxu0 %v1134
        %1479 = vmatpush.msra.mxu0 %v1133
        %1480 = vmatpush.msra.mxu0 %v1132
        %1481 = vmatpush.msra.mxu0 %v1131
        %1482 = vmatpush.msra.mxu0 %v1130
        %1483 = vmatpush.msra.mxu0 %v1129
        %1484 = vmatmul.f32.gmra.mxu0 %v1208
        %v1485 = vpop.f32.mrf.mxu0
        %v1486 = vadd.f32 %v1466, %v1485
        %1487 = vdwg.mxu0
        %1488 = vmatpush.msra.mxu0 %v1160
        %1489 = vmatpush.msra.mxu0 %v1159
        %1490 = vmatpush.msra.mxu0 %v1158
        %1491 = vmatpush.msra.mxu0 %v1157
        %1492 = vmatpush.msra.mxu0 %v1156
        %1493 = vmatpush.msra.mxu0 %v1155
        %1494 = vmatpush.msra.mxu0 %v1154
        %1495 = vmatpush.msra.mxu0 %v1153
        %1496 = vmatpush.msra.mxu0 %v1152
        %1497 = vmatpush.msra.mxu0 %v1151
        %1498 = vmatpush.msra.mxu0 %v1150
        %1499 = vmatpush.msra.mxu0 %v1149
        %1500 = vmatpush.msra.mxu0 %v1148
        %1501 = vmatpush.msra.mxu0 %v1147
        %1502 = vmatpush.msra.mxu0 %v1146
        %1503 = vmatpush.msra.mxu0 %v1145
        %1504 = vmatmul.f32.gmra.mxu0 %v1209
        %v1505 = vpop.f32.mrf.mxu0
        %v1506 = vadd.f32 %v1486, %v1505
        %1507 = vdwg.mxu0
        %1508 = vmatpush.msra.mxu0 %v1176
        %1509 = vmatpush.msra.mxu0 %v1175
        %1510 = vmatpush.msra.mxu0 %v1174
        %1511 = vmatpush.msra.mxu0 %v1173
        %1512 = vmatpush.msra.mxu0 %v1172
        %1513 = vmatpush.msra.mxu0 %v1171
        %1514 = vmatpush.msra.mxu0 %v1170
        %1515 = vmatpush.msra.mxu0 %v1169
        %1516 = vmatpush.msra.mxu0 %v1168
        %1517 = vmatpush.msra.mxu0 %v1167
        %1518 = vmatpush.msra.mxu0 %v1166
        %1519 = vmatpush.msra.mxu0 %v1165
        %1520 = vmatpush.msra.mxu0 %v1164
        %1521 = vmatpush.msra.mxu0 %v1163
        %1522 = vmatpush.msra.mxu0 %v1162
        %1523 = vmatpush.msra.mxu0 %v1161
        %1524 = vmatmul.f32.gmra.mxu0 %v1210
        %v1525 = vpop.f32.mrf.mxu0
        %v1526 = vadd.f32 %v1506, %v1525
        %1527 = vdwg.mxu0
        %1528 = vmatpush.msra.mxu0 %v1192
        %1529 = vmatpush.msra.mxu0 %v1191
        %1530 = vmatpush.msra.mxu0 %v1190
        %1531 = vmatpush.msra.mxu0 %v1189
        %1532 = vmatpush.msra.mxu0 %v1188
        %1533 = vmatpush.msra.mxu0 %v1187
        %1534 = vmatpush.msra.mxu0 %v1186
        %1535 = vmatpush.msra.mxu0 %v1185
        %1536 = vmatpush.msra.mxu0 %v1184
        %1537 = vmatpush.msra.mxu0 %v1183
        %1538 = vmatpush.msra.mxu0 %v1182
        %1539 = vmatpush.msra.mxu0 %v1181
        %1540 = vmatpush.msra.mxu0 %v1180
        %1541 = vmatpush.msra.mxu0 %v1179
        %1542 = vmatpush.msra.mxu0 %v1178
        %1543 = vmatpush.msra.mxu0 %v1177
        %1544 = vmatmul.f32.gmra.mxu0 %v1211
        %v1545 = vpop.f32.mrf.mxu0
        %v1546 = vadd.f32 %v1526, %v1545
        %1547 = vdwg.mxu0
        %vm1548 = vcmask 73728
        %1549 = vst.msk [vmem:[%s216] sm:$0x1] %vm1548, %v1546
        %s1550 = sand.u32 %s137, 1
        %s1551 = scalar_lea.sflag [#allocation4], %s1550
        %s1552 = sand.u32 %s137, 1
        %s1553 = scalar_lea.vmem [#allocation3], %s1552
        // Predicated region
        $region41: #{fc_out_forward.1} parent=39 // pred_check
          %p1554 = pneg %p147
        $region42: #{fc_out_forward.1} parent=39 // pred_check_branch
          %1556 = sbr.rel (%p1554) target = $region44
        $region43: #{fc_out_forward.1} parent=39 // pred_region
          %1558 = vsyncadd %s1551, 0
          %s1559 = scalar_lea.hbm %s5, %s19
          %s1561 = sshll.u32 %s1553, 4
          %s1562 = int_to_ptr.vmem [resolvable:$true] %s1561
          %s1563 = sshll.u32 %s1559, 4
          %s1564 = int_to_ptr.hbm [resolvable:$true] %s1563
          %1566 = dma.vmem_to_hbm [thread:$0]  %s1562, 16, %s1564, %s1551
        $region44: #{fc_out_forward.1} parent=39 // pred_fallthru
          _
      $region40: #{fc_out_forward.1} parent=5 // pred_fallthru
        _
      %p1567 = scmp.le.s32.totalorder 2, %s14
      // Predicated region
      $region45: #{fc_out_forward.1} parent=5 // pred_check
        %p1568 = pneg %p1567
      $region46: #{fc_out_forward.1} parent=5 // pred_check_branch
        %1570 = sbr.rel (%p1568) target = $region48
      $region47: #{fc_out_forward.1} parent=5 // pred_region
        %s1571 = ssub.s32 %s14, 2
        // Predicated region
        $region49: #{fc_out_forward.1} parent=47 // pred_check
          %p1572 = pneg %p153
        $region50: #{fc_out_forward.1} parent=47 // pred_check_branch
          %1574 = sbr.rel (%p1572) target = $region52
        $region51: #{fc_out_forward.1} parent=47 // pred_region
          %s1575 = sand.u32 %s138, 1
          %s1576 = scalar_lea.sflag [#allocation4], %s1575
          %s1577 = sand.u32 %s138, 1
          %s1578 = scalar_lea.vmem [#allocation3], %s1577
          %1580 = dma.done %s1576, 16
        $region52: #{fc_out_forward.1} parent=47 // pred_fallthru
          _
      $region48: #{fc_out_forward.1} parent=5 // pred_fallthru
        _
    $region6: #{fc_out_forward.1} parent=1 // loop_footer
      %s18 = sadd.s32 1, %s14
    $region7: #{fc_out_forward.1} parent=1 // loop_footer_branch
      %13 = sbr.rel target = $region3
    $region8: #{fc_out_forward.1} parent=1 // loop_exit
      _
    %1581 = vsyncpa [#allocation4], 1
    %s1582 = scalar_lea.sflag [#allocation4], 1
    %1583 = vsyncpa %s1582, 1

</llo_original>
